<compile_context>
chip_gen: v7x
topology: tpu7x:2x2x1
jax: 0.10.0
libtpu: 0.0.40
codegen_flags: <defaults>
</compile_context>

<pallas_src>
import jax
import jax.numpy as jnp
from jax.experimental import pallas as pl
from jax.experimental.pallas import tpu as pltpu

D_IN = 28 * 28        # 784
D_HID = 500           # bottleneck "d" from the module
D_HID_PAD = 512       # padded to a multiple of 128 for MXU/lane alignment
TB_MAX = 256          # batch tile (fills the 256-wide MXU on v6e/v7x)


def _round_up(x, m):
    return ((x + m - 1) // m) * m


def _autoencoder_kernel(x_ref, w1_ref, b1_ref, w2_ref, b2_ref, o_ref):
    # bf16 operands on the MXU, f32 accumulation; bias + tanh in f32.
    x = x_ref[...].astype(jnp.bfloat16)                                  # (TB, 784)
    h = jnp.tanh(
        jnp.dot(x, w1_ref[...], preferred_element_type=jnp.float32)
        + b1_ref[...]                                                    # (1, 512)
    )
    y = jnp.tanh(
        jnp.dot(h.astype(jnp.bfloat16), w2_ref[...],
                preferred_element_type=jnp.float32)
        + b2_ref[...]                                                    # (1, 784)
    )
    o_ref[...] = y.astype(o_ref.dtype)


def _vmem_limit_bytes(tb):
    weight_bytes = 2 * (D_IN * D_HID_PAD) * 2 + (D_HID_PAD + D_IN) * 4   # bf16 W + f32 b
    io_bytes = 2 * 2 * (tb * D_IN * 4)        # double-buffered x and out tiles (f32)
    hidden_bytes = tb * D_HID_PAD * 4         # intermediate activation
    total = weight_bytes + io_bytes + hidden_bytes
    # 4x headroom for compiler scratch / vreg spill, clamped to a safe range.
    return int(max(8 << 20, min(32 << 20, 4 * total)))


def autoencoder_forward(x, w1, b1, w2, b2):
    """x: (B, 784) f32. w1:(784,512) bf16, b1:(1,512) f32, w2:(512,784) bf16,
    b2:(1,784) f32. Returns (B, 784) f32 reconstruction."""
    B = x.shape[0]

    # Pick a sublane-aligned batch tile; pad the batch to a multiple of it.
    tb = min(TB_MAX, _round_up(B, 8))
    b_pad = _round_up(B, tb)
    if b_pad != B:
        x = jnp.pad(x, ((0, b_pad - B), (0, 0)))

    grid = (b_pad // tb,)

    cost = pl.CostEstimate(
        flops=2 * b_pad * (D_IN * D_HID_PAD + D_HID_PAD * D_IN),
        transcendentals=b_pad * (D_HID_PAD + D_IN),
        bytes_accessed=(2 * D_IN * D_HID_PAD * 2          # bf16 weights
                        + (D_HID_PAD + D_IN) * 4          # f32 biases
                        + 2 * b_pad * D_IN * 4),          # x in + y out (f32)
    )

    out = pl.pallas_call(
        _autoencoder_kernel,
        out_shape=jax.ShapeDtypeStruct((b_pad, D_IN), jnp.float32),
        grid=grid,
        in_specs=[
            pl.BlockSpec((tb, D_IN), lambda i: (i, 0)),            # x tile
            pl.BlockSpec((D_IN, D_HID_PAD), lambda i: (0, 0)),     # W1 (resident)
            pl.BlockSpec((1, D_HID_PAD), lambda i: (0, 0)),        # b1 (resident)
            pl.BlockSpec((D_HID_PAD, D_IN), lambda i: (0, 0)),     # W2 (resident)
            pl.BlockSpec((1, D_IN), lambda i: (0, 0)),             # b2 (resident)
        ],
        out_specs=pl.BlockSpec((tb, D_IN), lambda i: (i, 0)),
        compiler_params=pltpu.CompilerParams(
            dimension_semantics=("parallel",),
            vmem_limit_bytes=_vmem_limit_bytes(tb),
        ),
        cost_estimate=cost,
    )(x, w1, b1, w2, b2)

    return out[:B] if b_pad != B else out


def init_params(key):
    """PyTorch nn.Linear default init (U[-1/sqrt(fan_in), +]); hidden dim
    zero-padded 500->512; weights stored bf16, biases f32."""
    k1, k2, k3, k4 = jax.random.split(key, 4)
    lim1 = 1.0 / jnp.sqrt(jnp.float32(D_IN))
    lim2 = 1.0 / jnp.sqrt(jnp.float32(D_HID))
    w1 = jax.random.uniform(k1, (D_IN, D_HID), jnp.float32, -lim1, lim1)
    b1 = jax.random.uniform(k2, (1, D_HID), jnp.float32, -lim1, lim1)
    w2 = jax.random.uniform(k3, (D_HID, D_IN), jnp.float32, -lim2, lim2)
    b2 = jax.random.uniform(k4, (1, D_IN), jnp.float32, -lim2, lim2)
    # Zero-pad hidden dim to 512 (numerically identical) and narrow W to bf16.
    w1p = jnp.pad(w1, ((0, 0), (0, D_HID_PAD - D_HID))).astype(jnp.bfloat16)
    b1p = jnp.pad(b1, ((0, 0), (0, D_HID_PAD - D_HID)))
    w2p = jnp.pad(w2, ((0, D_HID_PAD - D_HID), (0, 0))).astype(jnp.bfloat16)
    return w1p, b1p, w2p, b2


if __name__ == "__main__":
    key = jax.random.PRNGKey(0)
    kp, ka, kb = jax.random.split(key, 3)
    w1, b1, w2, b2 = init_params(kp)

    # Mimic the notebook's y = (img[A] + img[B]) / 2 with synthetic "images".
    batch = 2
    img_a = jax.random.uniform(ka, (batch, D_IN), jnp.float32)
    img_b = jax.random.uniform(kb, (batch, D_IN), jnp.float32)
    y = (img_a + img_b) / 2.0

    out = jax.block_until_ready(autoencoder_forward(y, w1, b1, w2, b2))

    # Pure-JAX reference with the same bf16-operand / f32-accumulate recipe.
    yb = y.astype(jnp.bfloat16)
    h_ref = jnp.tanh(jnp.dot(yb, w1, preferred_element_type=jnp.float32) + b1)
    ref = jnp.tanh(
        jnp.dot(h_ref.astype(jnp.bfloat16), w2,
                preferred_element_type=jnp.float32) + b2
    )
    assert out.shape == (batch, D_IN)
    assert jnp.allclose(out, ref, atol=2e-3, rtol=2e-3)

    print("KERNEL_OK")
</pallas_src>

<mosaic_0001>
module attributes {stable_mosaic.version = 11 : i64} {
  func.func @_autoencoder_kernel(%arg0: i32, %arg1: memref<8x784xf32, #tpu.memory_space<vmem>>, %arg2: memref<784x512xbf16, #tpu.memory_space<vmem>>, %arg3: memref<1x512xf32, #tpu.memory_space<vmem>>, %arg4: memref<512x784xbf16, #tpu.memory_space<vmem>>, %arg5: memref<1x784xf32, #tpu.memory_space<vmem>>, %arg6: memref<8x784xf32, #tpu.memory_space<vmem>>) attributes {dimension_semantics = [#tpu.dimension_semantics<parallel>], iteration_bounds = array<i64: 1>, scalar_prefetch = 0 : i64, scratch_operands = 0 : i64, tpu.core_type = #tpu.core_type<tc>, window_params = [{transform_indices = @transform_0, window_bounds = array<i64: 8, 784>}, {pipeline_mode = #tpu.pipeline_mode<synchronous>, transform_indices = @transform_1, window_bounds = array<i64: 784, 512>}, {pipeline_mode = #tpu.pipeline_mode<synchronous>, transform_indices = @transform_2, window_bounds = array<i64: 1, 512>}, {pipeline_mode = #tpu.pipeline_mode<synchronous>, transform_indices = @transform_3, window_bounds = array<i64: 512, 784>}, {pipeline_mode = #tpu.pipeline_mode<synchronous>, transform_indices = @transform_4, window_bounds = array<i64: 1, 784>}, {transform_indices = @transform_5, window_bounds = array<i64: 8, 784>}]} {
    %c0 = arith.constant 0 : index
    %c0_0 = arith.constant 0 : index
    %0 = vector.load %arg1[%c0, %c0_0] : memref<8x784xf32, #tpu.memory_space<vmem>>, vector<8x784xf32>
    %1 = arith.truncf %0 : vector<8x784xf32> to vector<8x784xbf16>
    %c0_1 = arith.constant 0 : index
    %c0_2 = arith.constant 0 : index
    %2 = vector.load %arg2[%c0_1, %c0_2] : memref<784x512xbf16, #tpu.memory_space<vmem>>, vector<784x512xbf16>
    %cst = arith.constant dense<0.000000e+00> : vector<8x512xf32>
    %3 = tpu.matmul %1, %2, %cst {dimension_numbers = #tpu.dot_dimension_numbers<[1], [0], [0], [1], [0, 0, 1, 1], [], []>} : vector<8x784xbf16>, vector<784x512xbf16>, vector<8x512xf32> -> vector<8x512xf32>
    %c0_3 = arith.constant 0 : index
    %c0_4 = arith.constant 0 : index
    %4 = vector.load %arg3[%c0_3, %c0_4] : memref<1x512xf32, #tpu.memory_space<vmem>>, vector<1x512xf32>
    %5 = vector.broadcast %4 : vector<1x512xf32> to vector<8x512xf32>
    %6 = arith.addf %3, %5 : vector<8x512xf32>
    %7 = math.tanh %6 : vector<8x512xf32>
    %8 = arith.truncf %7 : vector<8x512xf32> to vector<8x512xbf16>
    %c0_5 = arith.constant 0 : index
    %c0_6 = arith.constant 0 : index
    %9 = vector.load %arg4[%c0_5, %c0_6] : memref<512x784xbf16, #tpu.memory_space<vmem>>, vector<512x784xbf16>
    %cst_7 = arith.constant dense<0.000000e+00> : vector<8x784xf32>
    %10 = tpu.matmul %8, %9, %cst_7 {dimension_numbers = #tpu.dot_dimension_numbers<[1], [0], [0], [1], [0, 0, 1, 1], [], []>} : vector<8x512xbf16>, vector<512x784xbf16>, vector<8x784xf32> -> vector<8x784xf32>
    %c0_8 = arith.constant 0 : index
    %c0_9 = arith.constant 0 : index
    %11 = vector.load %arg5[%c0_8, %c0_9] : memref<1x784xf32, #tpu.memory_space<vmem>>, vector<1x784xf32>
    %12 = vector.broadcast %11 : vector<1x784xf32> to vector<8x784xf32>
    %13 = arith.addf %10, %12 : vector<8x784xf32>
    %14 = math.tanh %13 : vector<8x784xf32>
    %c0_10 = arith.constant 0 : index
    %c0_11 = arith.constant 0 : index
    %15 = vector.load %arg6[%c0_10, %c0_11] : memref<8x784xf32, #tpu.memory_space<vmem>>, vector<8x784xf32>
    tpu.vector_store %arg6[%c0_10, %c0_11], %14 {strides = array<i32>} : memref<8x784xf32, #tpu.memory_space<vmem>>, vector<8x784xf32>,
    return
  }
  func.func @transform_0(%arg0: i32) -> (i32, i32) {
    %c0_i32 = arith.constant 0 : i32
    %c0_i32_0 = arith.constant 0 : i32
    return %arg0, %c0_i32 : i32, i32
  }
  func.func @transform_1(%arg0: i32) -> (i32, i32) {
    %c0_i32 = arith.constant 0 : i32
    %c0_i32_0 = arith.constant 0 : i32
    %c0_i32_1 = arith.constant 0 : i32
    return %c0_i32, %c0_i32_0 : i32, i32
  }
  func.func @transform_2(%arg0: i32) -> (i32, i32) {
    %c0_i32 = arith.constant 0 : i32
    %c0_i32_0 = arith.constant 0 : i32
    %c0_i32_1 = arith.constant 0 : i32
    return %c0_i32, %c0_i32_0 : i32, i32
  }
  func.func @transform_3(%arg0: i32) -> (i32, i32) {
    %c0_i32 = arith.constant 0 : i32
    %c0_i32_0 = arith.constant 0 : i32
    %c0_i32_1 = arith.constant 0 : i32
    return %c0_i32, %c0_i32_0 : i32, i32
  }
  func.func @transform_4(%arg0: i32) -> (i32, i32) {
    %c0_i32 = arith.constant 0 : i32
    %c0_i32_0 = arith.constant 0 : i32
    %c0_i32_1 = arith.constant 0 : i32
    return %c0_i32, %c0_i32_0 : i32, i32
  }
  func.func @transform_5(%arg0: i32) -> (i32, i32) {
    %c0_i32 = arith.constant 0 : i32
    %c0_i32_0 = arith.constant 0 : i32
    return %arg0, %c0_i32 : i32, i32
  }
}

</mosaic_0001>

<llo_original>
// kernel: tpu_custom_call.1
$region0: #{tpu_custom_call.1}
  #allocation0 [shape = 'u32[]', space=smem, size = 0x4, offset = 0x4, fixed_abs, tag = 'smem constant byte address 0x4 - core index']
  #allocation1 [shape = 'u32[144,128]{1,0:T(1,128)}', space=vmem, size = 0x12000, scoped, tag = 'internal scratch']
  %s0 = inlined_call_operand.vmem [shape: f32[8,784], index: 0, kind: input, shape index: {}]
  %s1 = inlined_call_operand.vmem [shape: bf16[784,512], index: 1, kind: input, shape index: {}]
  %s2 = inlined_call_operand.vmem [shape: f32[1,512], index: 2, kind: input, shape index: {}]
  %s3 = inlined_call_operand.vmem [shape: bf16[512,784], index: 3, kind: input, shape index: {}]
  %s4 = inlined_call_operand.vmem [shape: f32[1,784], index: 4, kind: input, shape index: {}]
  %s5 = inlined_call_operand.hbm [shape: f32[8,784], index: 5, kind: output, shape index: {}]
  %s6 = sld [smem:[#allocation0]]
  $region30: #{tpu_custom_call.1} parent=0
    _
  %s8 = ssub.s32 1, %s6
  %s9 = scalar_select 0, %s8, %s6
  $region1: #{tpu_custom_call.1} parent=0
    #allocation2 [shape = 'u8[28672]{0}', space=vmem, size = 0x7000, scoped, tag = 'output window, operand 0, single buffered']
    #allocation3 [shape = 's32[1]{0}', space=sflag, size = 0x4, scoped, tag = 'scoped memory for tpu_custom_call.1']
    %10 = vsyncpa [#allocation3], 0
    // Predicated region
    $region2: #{tpu_custom_call.1} parent=1 // pred_check
      _
    $region3: #{tpu_custom_call.1} parent=1 // pred_check_branch
      %12 = sbr.rel (0) target = $region5
    $region4: #{tpu_custom_call.1} parent=1 // pred_region
      _
    $region5: #{tpu_custom_call.1} parent=1 // pred_fallthru
      _
    // Predicated region
    $region6: #{tpu_custom_call.1} parent=1 // pred_check
      _
    $region7: #{tpu_custom_call.1} parent=1 // pred_check_branch
      %14 = sbr.rel (0) target = $region9
    $region8: #{tpu_custom_call.1} parent=1 // pred_region
      _
    $region9: #{tpu_custom_call.1} parent=1 // pred_fallthru
      _
    // Predicated region
    $region10: #{tpu_custom_call.1} parent=1 // pred_check
      _
    $region11: #{tpu_custom_call.1} parent=1 // pred_check_branch
      %16 = sbr.rel (0) target = $region13
    $region12: #{tpu_custom_call.1} parent=1 // pred_region
      _
    $region13: #{tpu_custom_call.1} parent=1 // pred_fallthru
      _
    // Predicated region
    $region14: #{tpu_custom_call.1} parent=1 // pred_check
      _
    $region15: #{tpu_custom_call.1} parent=1 // pred_check_branch
      %18 = sbr.rel (0) target = $region17
    $region16: #{tpu_custom_call.1} parent=1 // pred_region
      _
    $region17: #{tpu_custom_call.1} parent=1 // pred_fallthru
      _
    // Predicated region
    $region18: #{tpu_custom_call.1} parent=1 // pred_check
      _
    $region19: #{tpu_custom_call.1} parent=1 // pred_check_branch
      %20 = sbr.rel (0) target = $region21
    $region20: #{tpu_custom_call.1} parent=1 // pred_region
      _
    $region21: #{tpu_custom_call.1} parent=1 // pred_fallthru
      _
    %v22 = vld [vmem:[%s0] sm:$0xff]
    %v23 = vld [vmem:[%s0 + $0x8] sm:$0xff]
    %v24 = vld [vmem:[%s0 + $0x10] sm:$0xff]
    %v25 = vld [vmem:[%s0 + $0x18] sm:$0xff]
    %v26 = vld [vmem:[%s0 + $0x20] sm:$0xff]
    %v27 = vld [vmem:[%s0 + $0x28] sm:$0xff]
    %v28 = vld [vmem:[%s0 + $0x30] sm:$0xff]
    %v29 = vpack.c.bf16 %v22, %v22
    %v30 = vpack.c.bf16 %v23, %v23
    %v31 = vpack.c.bf16 %v24, %v24
    %v32 = vpack.c.bf16 %v25, %v25
    %v33 = vpack.c.bf16 %v26, %v26
    %v34 = vpack.c.bf16 %v27, %v27
    %v35 = vpack.c.bf16 %v28, %v28
    %v36 = vld [vmem:[%s1] sm:$0xff]
    %v37 = vld [vmem:[%s1 + $0x8] sm:$0xff]
    %v38 = vld [vmem:[%s1 + $0x10] sm:$0xff]
    %v39 = vld [vmem:[%s1 + $0x18] sm:$0xff]
    %v40 = vld [vmem:[%s1 + $0x20] sm:$0xff]
    %v41 = vld [vmem:[%s1 + $0x28] sm:$0xff]
    %v42 = vld [vmem:[%s1 + $0x30] sm:$0xff]
    %v43 = vld [vmem:[%s1 + $0x38] sm:$0xff]
    %v44 = vld [vmem:[%s1 + $0x40] sm:$0xff]
    %v45 = vld [vmem:[%s1 + $0x48] sm:$0xff]
    %v46 = vld [vmem:[%s1 + $0x50] sm:$0xff]
    %v47 = vld [vmem:[%s1 + $0x58] sm:$0xff]
    %v48 = vld [vmem:[%s1 + $0x60] sm:$0xff]
    %v49 = vld [vmem:[%s1 + $0x68] sm:$0xff]
    %v50 = vld [vmem:[%s1 + $0x70] sm:$0xff]
    %v51 = vld [vmem:[%s1 + $0x78] sm:$0xff]
    %v52 = vld [vmem:[%s1 + $0x80] sm:$0xff]
    %v53 = vld [vmem:[%s1 + $0x88] sm:$0xff]
    %v54 = vld [vmem:[%s1 + $0x90] sm:$0xff]
    %v55 = vld [vmem:[%s1 + $0x98] sm:$0xff]
    %v56 = vld [vmem:[%s1 + $0xa0] sm:$0xff]
    %v57 = vld [vmem:[%s1 + $0xa8] sm:$0xff]
    %v58 = vld [vmem:[%s1 + $0xb0] sm:$0xff]
    %v59 = vld [vmem:[%s1 + $0xb8] sm:$0xff]
    %v60 = vld [vmem:[%s1 + $0xc0] sm:$0xff]
    %v61 = vld [vmem:[%s1 + $0xc8] sm:$0xff]
    %v62 = vld [vmem:[%s1 + $0xd0] sm:$0xff]
    %v63 = vld [vmem:[%s1 + $0xd8] sm:$0xff]
    %v64 = vld [vmem:[%s1 + $0xe0] sm:$0xff]
    %v65 = vld [vmem:[%s1 + $0xe8] sm:$0xff]
    %v66 = vld [vmem:[%s1 + $0xf0] sm:$0xff]
    %v67 = vld [vmem:[%s1 + $0xf8] sm:$0xff]
    %v68 = vld [vmem:[%s1 + $0x100] sm:$0xff]
    %v69 = vld [vmem:[%s1 + $0x108] sm:$0xff]
    %v70 = vld [vmem:[%s1 + $0x110] sm:$0xff]
    %v71 = vld [vmem:[%s1 + $0x118] sm:$0xff]
    %v72 = vld [vmem:[%s1 + $0x120] sm:$0xff]
    %v73 = vld [vmem:[%s1 + $0x128] sm:$0xff]
    %v74 = vld [vmem:[%s1 + $0x130] sm:$0xff]
    %v75 = vld [vmem:[%s1 + $0x138] sm:$0xff]
    %v76 = vld [vmem:[%s1 + $0x140] sm:$0xff]
    %v77 = vld [vmem:[%s1 + $0x148] sm:$0xff]
    %v78 = vld [vmem:[%s1 + $0x150] sm:$0xff]
    %v79 = vld [vmem:[%s1 + $0x158] sm:$0xff]
    %v80 = vld [vmem:[%s1 + $0x160] sm:$0xff]
    %v81 = vld [vmem:[%s1 + $0x168] sm:$0xff]
    %v82 = vld [vmem:[%s1 + $0x170] sm:$0xff]
    %v83 = vld [vmem:[%s1 + $0x178] sm:$0xff]
    %v84 = vld [vmem:[%s1 + $0x180] sm:$0xff]
    %v85 = vld [vmem:[%s1 + $0x188] sm:$0xff]
    %v86 = vld [vmem:[%s1 + $0x190] sm:$0xff]
    %v87 = vld [vmem:[%s1 + $0x198] sm:$0xff]
    %v88 = vld [vmem:[%s1 + $0x1a0] sm:$0xff]
    %v89 = vld [vmem:[%s1 + $0x1a8] sm:$0xff]
    %v90 = vld [vmem:[%s1 + $0x1b0] sm:$0xff]
    %v91 = vld [vmem:[%s1 + $0x1b8] sm:$0xff]
    %v92 = vld [vmem:[%s1 + $0x1c0] sm:$0xff]
    %v93 = vld [vmem:[%s1 + $0x1c8] sm:$0xff]
    %v94 = vld [vmem:[%s1 + $0x1d0] sm:$0xff]
    %v95 = vld [vmem:[%s1 + $0x1d8] sm:$0xff]
    %v96 = vld [vmem:[%s1 + $0x1e0] sm:$0xff]
    %v97 = vld [vmem:[%s1 + $0x1e8] sm:$0xff]
    %v98 = vld [vmem:[%s1 + $0x1f0] sm:$0xff]
    %v99 = vld [vmem:[%s1 + $0x1f8] sm:$0xff]
    %v100 = vld [vmem:[%s1 + $0x200] sm:$0xff]
    %v101 = vld [vmem:[%s1 + $0x208] sm:$0xff]
    %v102 = vld [vmem:[%s1 + $0x210] sm:$0xff]
    %v103 = vld [vmem:[%s1 + $0x218] sm:$0xff]
    %v104 = vld [vmem:[%s1 + $0x220] sm:$0xff]
    %v105 = vld [vmem:[%s1 + $0x228] sm:$0xff]
    %v106 = vld [vmem:[%s1 + $0x230] sm:$0xff]
    %v107 = vld [vmem:[%s1 + $0x238] sm:$0xff]
    %v108 = vld [vmem:[%s1 + $0x240] sm:$0xff]
    %v109 = vld [vmem:[%s1 + $0x248] sm:$0xff]
    %v110 = vld [vmem:[%s1 + $0x250] sm:$0xff]
    %v111 = vld [vmem:[%s1 + $0x258] sm:$0xff]
    %v112 = vld [vmem:[%s1 + $0x260] sm:$0xff]
    %v113 = vld [vmem:[%s1 + $0x268] sm:$0xff]
    %v114 = vld [vmem:[%s1 + $0x270] sm:$0xff]
    %v115 = vld [vmem:[%s1 + $0x278] sm:$0xff]
    %v116 = vld [vmem:[%s1 + $0x280] sm:$0xff]
    %v117 = vld [vmem:[%s1 + $0x288] sm:$0xff]
    %v118 = vld [vmem:[%s1 + $0x290] sm:$0xff]
    %v119 = vld [vmem:[%s1 + $0x298] sm:$0xff]
    %v120 = vld [vmem:[%s1 + $0x2a0] sm:$0xff]
    %v121 = vld [vmem:[%s1 + $0x2a8] sm:$0xff]
    %v122 = vld [vmem:[%s1 + $0x2b0] sm:$0xff]
    %v123 = vld [vmem:[%s1 + $0x2b8] sm:$0xff]
    %v124 = vld [vmem:[%s1 + $0x2c0] sm:$0xff]
    %v125 = vld [vmem:[%s1 + $0x2c8] sm:$0xff]
    %v126 = vld [vmem:[%s1 + $0x2d0] sm:$0xff]
    %v127 = vld [vmem:[%s1 + $0x2d8] sm:$0xff]
    %v128 = vld [vmem:[%s1 + $0x2e0] sm:$0xff]
    %v129 = vld [vmem:[%s1 + $0x2e8] sm:$0xff]
    %v130 = vld [vmem:[%s1 + $0x2f0] sm:$0xff]
    %v131 = vld [vmem:[%s1 + $0x2f8] sm:$0xff]
    %v132 = vld [vmem:[%s1 + $0x300] sm:$0xff]
    %v133 = vld [vmem:[%s1 + $0x308] sm:$0xff]
    %v134 = vld [vmem:[%s1 + $0x310] sm:$0xff]
    %v135 = vld [vmem:[%s1 + $0x318] sm:$0xff]
    %v136 = vld [vmem:[%s1 + $0x320] sm:$0xff]
    %v137 = vld [vmem:[%s1 + $0x328] sm:$0xff]
    %v138 = vld [vmem:[%s1 + $0x330] sm:$0xff]
    %v139 = vld [vmem:[%s1 + $0x338] sm:$0xff]
    %v140 = vld [vmem:[%s1 + $0x340] sm:$0xff]
    %v141 = vld [vmem:[%s1 + $0x348] sm:$0xff]
    %v142 = vld [vmem:[%s1 + $0x350] sm:$0xff]
    %v143 = vld [vmem:[%s1 + $0x358] sm:$0xff]
    %v144 = vld [vmem:[%s1 + $0x360] sm:$0xff]
    %v145 = vld [vmem:[%s1 + $0x368] sm:$0xff]
    %v146 = vld [vmem:[%s1 + $0x370] sm:$0xff]
    %v147 = vld [vmem:[%s1 + $0x378] sm:$0xff]
    %v148 = vld [vmem:[%s1 + $0x380] sm:$0xff]
    %v149 = vld [vmem:[%s1 + $0x388] sm:$0xff]
    %v150 = vld [vmem:[%s1 + $0x390] sm:$0xff]
    %v151 = vld [vmem:[%s1 + $0x398] sm:$0xff]
    %v152 = vld [vmem:[%s1 + $0x3a0] sm:$0xff]
    %v153 = vld [vmem:[%s1 + $0x3a8] sm:$0xff]
    %v154 = vld [vmem:[%s1 + $0x3b0] sm:$0xff]
    %v155 = vld [vmem:[%s1 + $0x3b8] sm:$0xff]
    %v156 = vld [vmem:[%s1 + $0x3c0] sm:$0xff]
    %v157 = vld [vmem:[%s1 + $0x3c8] sm:$0xff]
    %v158 = vld [vmem:[%s1 + $0x3d0] sm:$0xff]
    %v159 = vld [vmem:[%s1 + $0x3d8] sm:$0xff]
    %v160 = vld [vmem:[%s1 + $0x3e0] sm:$0xff]
    %v161 = vld [vmem:[%s1 + $0x3e8] sm:$0xff]
    %v162 = vld [vmem:[%s1 + $0x3f0] sm:$0xff]
    %v163 = vld [vmem:[%s1 + $0x3f8] sm:$0xff]
    %v164 = vld [vmem:[%s1 + $0x400] sm:$0xff]
    %v165 = vld [vmem:[%s1 + $0x408] sm:$0xff]
    %v166 = vld [vmem:[%s1 + $0x410] sm:$0xff]
    %v167 = vld [vmem:[%s1 + $0x418] sm:$0xff]
    %v168 = vld [vmem:[%s1 + $0x420] sm:$0xff]
    %v169 = vld [vmem:[%s1 + $0x428] sm:$0xff]
    %v170 = vld [vmem:[%s1 + $0x430] sm:$0xff]
    %v171 = vld [vmem:[%s1 + $0x438] sm:$0xff]
    %v172 = vld [vmem:[%s1 + $0x440] sm:$0xff]
    %v173 = vld [vmem:[%s1 + $0x448] sm:$0xff]
    %v174 = vld [vmem:[%s1 + $0x450] sm:$0xff]
    %v175 = vld [vmem:[%s1 + $0x458] sm:$0xff]
    %v176 = vld [vmem:[%s1 + $0x460] sm:$0xff]
    %v177 = vld [vmem:[%s1 + $0x468] sm:$0xff]
    %v178 = vld [vmem:[%s1 + $0x470] sm:$0xff]
    %v179 = vld [vmem:[%s1 + $0x478] sm:$0xff]
    %v180 = vld [vmem:[%s1 + $0x480] sm:$0xff]
    %v181 = vld [vmem:[%s1 + $0x488] sm:$0xff]
    %v182 = vld [vmem:[%s1 + $0x490] sm:$0xff]
    %v183 = vld [vmem:[%s1 + $0x498] sm:$0xff]
    %v184 = vld [vmem:[%s1 + $0x4a0] sm:$0xff]
    %v185 = vld [vmem:[%s1 + $0x4a8] sm:$0xff]
    %v186 = vld [vmem:[%s1 + $0x4b0] sm:$0xff]
    %v187 = vld [vmem:[%s1 + $0x4b8] sm:$0xff]
    %v188 = vld [vmem:[%s1 + $0x4c0] sm:$0xff]
    %v189 = vld [vmem:[%s1 + $0x4c8] sm:$0xff]
    %v190 = vld [vmem:[%s1 + $0x4d0] sm:$0xff]
    %v191 = vld [vmem:[%s1 + $0x4d8] sm:$0xff]
    %v192 = vld [vmem:[%s1 + $0x4e0] sm:$0xff]
    %v193 = vld [vmem:[%s1 + $0x4e8] sm:$0xff]
    %v194 = vld [vmem:[%s1 + $0x4f0] sm:$0xff]
    %v195 = vld [vmem:[%s1 + $0x4f8] sm:$0xff]
    %v196 = vld [vmem:[%s1 + $0x500] sm:$0xff]
    %v197 = vld [vmem:[%s1 + $0x508] sm:$0xff]
    %v198 = vld [vmem:[%s1 + $0x510] sm:$0xff]
    %v199 = vld [vmem:[%s1 + $0x518] sm:$0xff]
    %v200 = vld [vmem:[%s1 + $0x520] sm:$0xff]
    %v201 = vld [vmem:[%s1 + $0x528] sm:$0xff]
    %v202 = vld [vmem:[%s1 + $0x530] sm:$0xff]
    %v203 = vld [vmem:[%s1 + $0x538] sm:$0xff]
    %v204 = vld [vmem:[%s1 + $0x540] sm:$0xff]
    %v205 = vld [vmem:[%s1 + $0x548] sm:$0xff]
    %v206 = vld [vmem:[%s1 + $0x550] sm:$0xff]
    %v207 = vld [vmem:[%s1 + $0x558] sm:$0xff]
    %v208 = vld [vmem:[%s1 + $0x560] sm:$0xff]
    %v209 = vld [vmem:[%s1 + $0x568] sm:$0xff]
    %v210 = vld [vmem:[%s1 + $0x570] sm:$0xff]
    %v211 = vld [vmem:[%s1 + $0x578] sm:$0xff]
    %v212 = vld [vmem:[%s1 + $0x580] sm:$0xff]
    %v213 = vld [vmem:[%s1 + $0x588] sm:$0xff]
    %v214 = vld [vmem:[%s1 + $0x590] sm:$0xff]
    %v215 = vld [vmem:[%s1 + $0x598] sm:$0xff]
    %v216 = vld [vmem:[%s1 + $0x5a0] sm:$0xff]
    %v217 = vld [vmem:[%s1 + $0x5a8] sm:$0xff]
    %v218 = vld [vmem:[%s1 + $0x5b0] sm:$0xff]
    %v219 = vld [vmem:[%s1 + $0x5b8] sm:$0xff]
    %v220 = vld [vmem:[%s1 + $0x5c0] sm:$0xff]
    %v221 = vld [vmem:[%s1 + $0x5c8] sm:$0xff]
    %v222 = vld [vmem:[%s1 + $0x5d0] sm:$0xff]
    %v223 = vld [vmem:[%s1 + $0x5d8] sm:$0xff]
    %v224 = vld [vmem:[%s1 + $0x5e0] sm:$0xff]
    %v225 = vld [vmem:[%s1 + $0x5e8] sm:$0xff]
    %v226 = vld [vmem:[%s1 + $0x5f0] sm:$0xff]
    %v227 = vld [vmem:[%s1 + $0x5f8] sm:$0xff]
    %v228 = vld [vmem:[%s1 + $0x600] sm:$0xff]
    %v229 = vld [vmem:[%s1 + $0x608] sm:$0xff]
    %v230 = vld [vmem:[%s1 + $0x610] sm:$0xff]
    %v231 = vld [vmem:[%s1 + $0x618] sm:$0xff]
    %v232 = vld [vmem:[%s2] sm:$0xf]
    %v234 = vlaneseq
    %v235 = vshrl.u32 %v234, 7
    %v236 = vsub.s32 0, %v235
    %v237 = vrot.slane %v232, %v236
    %v238 = vlaneseq
    %v239 = vshrl.u32 %v238, 7
    %v240 = vsub.s32 1, %v239
    %v241 = vrot.slane %v232, %v240
    %v242 = vlaneseq
    %v243 = vshrl.u32 %v242, 7
    %v244 = vsub.s32 2, %v243
    %v245 = vrot.slane %v232, %v244
    %v246 = vlaneseq
    %v247 = vshrl.u32 %v246, 7
    %v248 = vsub.s32 3, %v247
    %v249 = vrot.slane %v232, %v248
    %v450 = vunpack.c.l.b16 %v36
    %v451 = vunpack.c.h.b16 %v36
    %v452 = vunpack.c.l.b16 %v37
    %v453 = vunpack.c.h.b16 %v37
    %v454 = vunpack.c.l.b16 %v38
    %v455 = vunpack.c.h.b16 %v38
    %v456 = vunpack.c.l.b16 %v39
    %v457 = vunpack.c.h.b16 %v39
    %v458 = vunpack.c.l.b16 %v40
    %v459 = vunpack.c.h.b16 %v40
    %v460 = vunpack.c.l.b16 %v41
    %v461 = vunpack.c.h.b16 %v41
    %v462 = vunpack.c.l.b16 %v42
    %v463 = vunpack.c.h.b16 %v42
    %v464 = vunpack.c.l.b16 %v43
    %v465 = vunpack.c.h.b16 %v43
    %v466 = vunpack.c.l.b16 %v44
    %v467 = vunpack.c.h.b16 %v44
    %v468 = vunpack.c.l.b16 %v45
    %v469 = vunpack.c.h.b16 %v45
    %v470 = vunpack.c.l.b16 %v46
    %v471 = vunpack.c.h.b16 %v46
    %v472 = vunpack.c.l.b16 %v47
    %v473 = vunpack.c.h.b16 %v47
    %v474 = vunpack.c.l.b16 %v48
    %v475 = vunpack.c.h.b16 %v48
    %v476 = vunpack.c.l.b16 %v49
    %v477 = vunpack.c.h.b16 %v49
    %v478 = vunpack.c.l.b16 %v50
    %v479 = vunpack.c.h.b16 %v50
    %v480 = vunpack.c.l.b16 %v51
    %v481 = vunpack.c.h.b16 %v51
    %v482 = vunpack.c.l.b16 %v52
    %v483 = vunpack.c.h.b16 %v52
    %v484 = vunpack.c.l.b16 %v53
    %v485 = vunpack.c.h.b16 %v53
    %v486 = vunpack.c.l.b16 %v54
    %v487 = vunpack.c.h.b16 %v54
    %v488 = vunpack.c.l.b16 %v55
    %v489 = vunpack.c.h.b16 %v55
    %v490 = vunpack.c.l.b16 %v56
    %v491 = vunpack.c.h.b16 %v56
    %v492 = vunpack.c.l.b16 %v57
    %v493 = vunpack.c.h.b16 %v57
    %v494 = vunpack.c.l.b16 %v58
    %v495 = vunpack.c.h.b16 %v58
    %v496 = vunpack.c.l.b16 %v59
    %v497 = vunpack.c.h.b16 %v59
    %v498 = vunpack.c.l.b16 %v60
    %v499 = vunpack.c.h.b16 %v60
    %v500 = vunpack.c.l.b16 %v61
    %v501 = vunpack.c.h.b16 %v61
    %v502 = vunpack.c.l.b16 %v62
    %v503 = vunpack.c.h.b16 %v62
    %v504 = vunpack.c.l.b16 %v63
    %v505 = vunpack.c.h.b16 %v63
    %v506 = vunpack.c.l.b16 %v64
    %v507 = vunpack.c.h.b16 %v64
    %v508 = vunpack.c.l.b16 %v65
    %v509 = vunpack.c.h.b16 %v65
    %v510 = vunpack.c.l.b16 %v66
    %v511 = vunpack.c.h.b16 %v66
    %v512 = vunpack.c.l.b16 %v67
    %v513 = vunpack.c.h.b16 %v67
    %v514 = vunpack.c.l.b16 %v68
    %v515 = vunpack.c.h.b16 %v68
    %v516 = vunpack.c.l.b16 %v69
    %v517 = vunpack.c.h.b16 %v69
    %v518 = vunpack.c.l.b16 %v70
    %v519 = vunpack.c.h.b16 %v70
    %v520 = vunpack.c.l.b16 %v71
    %v521 = vunpack.c.h.b16 %v71
    %v522 = vunpack.c.l.b16 %v72
    %v523 = vunpack.c.h.b16 %v72
    %v524 = vunpack.c.l.b16 %v73
    %v525 = vunpack.c.h.b16 %v73
    %v526 = vunpack.c.l.b16 %v74
    %v527 = vunpack.c.h.b16 %v74
    %v528 = vunpack.c.l.b16 %v75
    %v529 = vunpack.c.h.b16 %v75
    %v530 = vunpack.c.l.b16 %v76
    %v531 = vunpack.c.h.b16 %v76
    %v532 = vunpack.c.l.b16 %v77
    %v533 = vunpack.c.h.b16 %v77
    %v534 = vunpack.c.l.b16 %v78
    %v535 = vunpack.c.h.b16 %v78
    %v536 = vunpack.c.l.b16 %v79
    %v537 = vunpack.c.h.b16 %v79
    %v538 = vunpack.c.l.b16 %v80
    %v539 = vunpack.c.h.b16 %v80
    %v540 = vunpack.c.l.b16 %v81
    %v541 = vunpack.c.h.b16 %v81
    %v542 = vunpack.c.l.b16 %v82
    %v543 = vunpack.c.h.b16 %v82
    %v544 = vunpack.c.l.b16 %v83
    %v545 = vunpack.c.h.b16 %v83
    %v546 = vunpack.c.l.b16 %v84
    %v547 = vunpack.c.h.b16 %v84
    %v548 = vunpack.c.l.b16 %v85
    %v549 = vunpack.c.h.b16 %v85
    %v550 = vunpack.c.l.b16 %v86
    %v551 = vunpack.c.h.b16 %v86
    %v552 = vunpack.c.l.b16 %v87
    %v553 = vunpack.c.h.b16 %v87
    %v554 = vunpack.c.l.b16 %v88
    %v555 = vunpack.c.h.b16 %v88
    %v556 = vunpack.c.l.b16 %v89
    %v557 = vunpack.c.h.b16 %v89
    %v558 = vunpack.c.l.b16 %v90
    %v559 = vunpack.c.h.b16 %v90
    %v560 = vunpack.c.l.b16 %v91
    %v561 = vunpack.c.h.b16 %v91
    %v562 = vunpack.c.l.b16 %v92
    %v563 = vunpack.c.h.b16 %v92
    %v564 = vunpack.c.l.b16 %v93
    %v565 = vunpack.c.h.b16 %v93
    %v566 = vunpack.c.l.b16 %v94
    %v567 = vunpack.c.h.b16 %v94
    %v568 = vunpack.c.l.b16 %v95
    %v569 = vunpack.c.h.b16 %v95
    %v570 = vunpack.c.l.b16 %v96
    %v571 = vunpack.c.h.b16 %v96
    %v572 = vunpack.c.l.b16 %v97
    %v573 = vunpack.c.h.b16 %v97
    %v574 = vunpack.c.l.b16 %v98
    %v575 = vunpack.c.h.b16 %v98
    %v576 = vunpack.c.l.b16 %v99
    %v577 = vunpack.c.h.b16 %v99
    %v578 = vunpack.c.l.b16 %v100
    %v579 = vunpack.c.h.b16 %v100
    %v580 = vunpack.c.l.b16 %v101
    %v581 = vunpack.c.h.b16 %v101
    %v582 = vunpack.c.l.b16 %v102
    %v583 = vunpack.c.h.b16 %v102
    %v584 = vunpack.c.l.b16 %v103
    %v585 = vunpack.c.h.b16 %v103
    %v586 = vunpack.c.l.b16 %v104
    %v587 = vunpack.c.h.b16 %v104
    %v588 = vunpack.c.l.b16 %v105
    %v589 = vunpack.c.h.b16 %v105
    %v590 = vunpack.c.l.b16 %v106
    %v591 = vunpack.c.h.b16 %v106
    %v592 = vunpack.c.l.b16 %v107
    %v593 = vunpack.c.h.b16 %v107
    %v594 = vunpack.c.l.b16 %v108
    %v595 = vunpack.c.h.b16 %v108
    %v596 = vunpack.c.l.b16 %v109
    %v597 = vunpack.c.h.b16 %v109
    %v598 = vunpack.c.l.b16 %v110
    %v599 = vunpack.c.h.b16 %v110
    %v600 = vunpack.c.l.b16 %v111
    %v601 = vunpack.c.h.b16 %v111
    %v602 = vunpack.c.l.b16 %v112
    %v603 = vunpack.c.h.b16 %v112
    %v604 = vunpack.c.l.b16 %v113
    %v605 = vunpack.c.h.b16 %v113
    %v606 = vunpack.c.l.b16 %v114
    %v607 = vunpack.c.h.b16 %v114
    %v608 = vunpack.c.l.b16 %v115
    %v609 = vunpack.c.h.b16 %v115
    %v610 = vunpack.c.l.b16 %v116
    %v611 = vunpack.c.h.b16 %v116
    %v612 = vunpack.c.l.b16 %v117
    %v613 = vunpack.c.h.b16 %v117
    %v614 = vunpack.c.l.b16 %v118
    %v615 = vunpack.c.h.b16 %v118
    %v616 = vunpack.c.l.b16 %v119
    %v617 = vunpack.c.h.b16 %v119
    %v618 = vunpack.c.l.b16 %v120
    %v619 = vunpack.c.h.b16 %v120
    %v620 = vunpack.c.l.b16 %v121
    %v621 = vunpack.c.h.b16 %v121
    %v622 = vunpack.c.l.b16 %v122
    %v623 = vunpack.c.h.b16 %v122
    %v624 = vunpack.c.l.b16 %v123
    %v625 = vunpack.c.h.b16 %v123
    %v626 = vunpack.c.l.b16 %v124
    %v627 = vunpack.c.h.b16 %v124
    %v628 = vunpack.c.l.b16 %v125
    %v629 = vunpack.c.h.b16 %v125
    %v630 = vunpack.c.l.b16 %v126
    %v631 = vunpack.c.h.b16 %v126
    %v632 = vunpack.c.l.b16 %v127
    %v633 = vunpack.c.h.b16 %v127
    %v634 = vunpack.c.l.b16 %v128
    %v635 = vunpack.c.h.b16 %v128
    %v636 = vunpack.c.l.b16 %v129
    %v637 = vunpack.c.h.b16 %v129
    %v638 = vunpack.c.l.b16 %v130
    %v639 = vunpack.c.h.b16 %v130
    %v640 = vunpack.c.l.b16 %v131
    %v641 = vunpack.c.h.b16 %v131
    %v642 = vunpack.c.l.b16 %v132
    %v643 = vunpack.c.h.b16 %v132
    %v644 = vunpack.c.l.b16 %v133
    %v645 = vunpack.c.h.b16 %v133
    %v646 = vunpack.c.l.b16 %v134
    %v647 = vunpack.c.h.b16 %v134
    %v648 = vunpack.c.l.b16 %v135
    %v649 = vunpack.c.h.b16 %v135
    %v650 = vunpack.c.l.b16 %v136
    %v651 = vunpack.c.h.b16 %v136
    %v652 = vunpack.c.l.b16 %v137
    %v653 = vunpack.c.h.b16 %v137
    %v654 = vunpack.c.l.b16 %v138
    %v655 = vunpack.c.h.b16 %v138
    %v656 = vunpack.c.l.b16 %v139
    %v657 = vunpack.c.h.b16 %v139
    %v658 = vunpack.c.l.b16 %v140
    %v659 = vunpack.c.h.b16 %v140
    %v660 = vunpack.c.l.b16 %v141
    %v661 = vunpack.c.h.b16 %v141
    %v662 = vunpack.c.l.b16 %v142
    %v663 = vunpack.c.h.b16 %v142
    %v664 = vunpack.c.l.b16 %v143
    %v665 = vunpack.c.h.b16 %v143
    %v666 = vunpack.c.l.b16 %v144
    %v667 = vunpack.c.h.b16 %v144
    %v668 = vunpack.c.l.b16 %v145
    %v669 = vunpack.c.h.b16 %v145
    %v670 = vunpack.c.l.b16 %v146
    %v671 = vunpack.c.h.b16 %v146
    %v672 = vunpack.c.l.b16 %v147
    %v673 = vunpack.c.h.b16 %v147
    %v674 = vunpack.c.l.b16 %v148
    %v675 = vunpack.c.h.b16 %v148
    %v676 = vunpack.c.l.b16 %v149
    %v677 = vunpack.c.h.b16 %v149
    %v678 = vunpack.c.l.b16 %v150
    %v679 = vunpack.c.h.b16 %v150
    %v680 = vunpack.c.l.b16 %v151
    %v681 = vunpack.c.h.b16 %v151
    %v682 = vunpack.c.l.b16 %v152
    %v683 = vunpack.c.h.b16 %v152
    %v684 = vunpack.c.l.b16 %v153
    %v685 = vunpack.c.h.b16 %v153
    %v686 = vunpack.c.l.b16 %v154
    %v687 = vunpack.c.h.b16 %v154
    %v688 = vunpack.c.l.b16 %v155
    %v689 = vunpack.c.h.b16 %v155
    %v690 = vunpack.c.l.b16 %v156
    %v691 = vunpack.c.h.b16 %v156
    %v692 = vunpack.c.l.b16 %v157
    %v693 = vunpack.c.h.b16 %v157
    %v694 = vunpack.c.l.b16 %v158
    %v695 = vunpack.c.h.b16 %v158
    %v696 = vunpack.c.l.b16 %v159
    %v697 = vunpack.c.h.b16 %v159
    %v698 = vunpack.c.l.b16 %v160
    %v699 = vunpack.c.h.b16 %v160
    %v700 = vunpack.c.l.b16 %v161
    %v701 = vunpack.c.h.b16 %v161
    %v702 = vunpack.c.l.b16 %v162
    %v703 = vunpack.c.h.b16 %v162
    %v704 = vunpack.c.l.b16 %v163
    %v705 = vunpack.c.h.b16 %v163
    %v706 = vunpack.c.l.b16 %v164
    %v707 = vunpack.c.h.b16 %v164
    %v708 = vunpack.c.l.b16 %v165
    %v709 = vunpack.c.h.b16 %v165
    %v710 = vunpack.c.l.b16 %v166
    %v711 = vunpack.c.h.b16 %v166
    %v712 = vunpack.c.l.b16 %v167
    %v713 = vunpack.c.h.b16 %v167
    %v714 = vunpack.c.l.b16 %v168
    %v715 = vunpack.c.h.b16 %v168
    %v716 = vunpack.c.l.b16 %v169
    %v717 = vunpack.c.h.b16 %v169
    %v718 = vunpack.c.l.b16 %v170
    %v719 = vunpack.c.h.b16 %v170
    %v720 = vunpack.c.l.b16 %v171
    %v721 = vunpack.c.h.b16 %v171
    %v722 = vunpack.c.l.b16 %v172
    %v723 = vunpack.c.h.b16 %v172
    %v724 = vunpack.c.l.b16 %v173
    %v725 = vunpack.c.h.b16 %v173
    %v726 = vunpack.c.l.b16 %v174
    %v727 = vunpack.c.h.b16 %v174
    %v728 = vunpack.c.l.b16 %v175
    %v729 = vunpack.c.h.b16 %v175
    %v730 = vunpack.c.l.b16 %v176
    %v731 = vunpack.c.h.b16 %v176
    %v732 = vunpack.c.l.b16 %v177
    %v733 = vunpack.c.h.b16 %v177
    %v734 = vunpack.c.l.b16 %v178
    %v735 = vunpack.c.h.b16 %v178
    %v736 = vunpack.c.l.b16 %v179
    %v737 = vunpack.c.h.b16 %v179
    %v738 = vunpack.c.l.b16 %v180
    %v739 = vunpack.c.h.b16 %v180
    %v740 = vunpack.c.l.b16 %v181
    %v741 = vunpack.c.h.b16 %v181
    %v742 = vunpack.c.l.b16 %v182
    %v743 = vunpack.c.h.b16 %v182
    %v744 = vunpack.c.l.b16 %v183
    %v745 = vunpack.c.h.b16 %v183
    %v746 = vunpack.c.l.b16 %v184
    %v747 = vunpack.c.h.b16 %v184
    %v748 = vunpack.c.l.b16 %v185
    %v749 = vunpack.c.h.b16 %v185
    %v750 = vunpack.c.l.b16 %v186
    %v751 = vunpack.c.h.b16 %v186
    %v752 = vunpack.c.l.b16 %v187
    %v753 = vunpack.c.h.b16 %v187
    %v754 = vunpack.c.l.b16 %v188
    %v755 = vunpack.c.h.b16 %v188
    %v756 = vunpack.c.l.b16 %v189
    %v757 = vunpack.c.h.b16 %v189
    %v758 = vunpack.c.l.b16 %v190
    %v759 = vunpack.c.h.b16 %v190
    %v760 = vunpack.c.l.b16 %v191
    %v761 = vunpack.c.h.b16 %v191
    %v762 = vunpack.c.l.b16 %v192
    %v763 = vunpack.c.h.b16 %v192
    %v764 = vunpack.c.l.b16 %v193
    %v765 = vunpack.c.h.b16 %v193
    %v766 = vunpack.c.l.b16 %v194
    %v767 = vunpack.c.h.b16 %v194
    %v768 = vunpack.c.l.b16 %v195
    %v769 = vunpack.c.h.b16 %v195
    %v770 = vunpack.c.l.b16 %v196
    %v771 = vunpack.c.h.b16 %v196
    %v772 = vunpack.c.l.b16 %v197
    %v773 = vunpack.c.h.b16 %v197
    %v774 = vunpack.c.l.b16 %v198
    %v775 = vunpack.c.h.b16 %v198
    %v776 = vunpack.c.l.b16 %v199
    %v777 = vunpack.c.h.b16 %v199
    %v778 = vunpack.c.l.b16 %v200
    %v779 = vunpack.c.h.b16 %v200
    %v780 = vunpack.c.l.b16 %v201
    %v781 = vunpack.c.h.b16 %v201
    %v782 = vunpack.c.l.b16 %v202
    %v783 = vunpack.c.h.b16 %v202
    %v784 = vunpack.c.l.b16 %v203
    %v785 = vunpack.c.h.b16 %v203
    %v786 = vunpack.c.l.b16 %v204
    %v787 = vunpack.c.h.b16 %v204
    %v788 = vunpack.c.l.b16 %v205
    %v789 = vunpack.c.h.b16 %v205
    %v790 = vunpack.c.l.b16 %v206
    %v791 = vunpack.c.h.b16 %v206
    %v792 = vunpack.c.l.b16 %v207
    %v793 = vunpack.c.h.b16 %v207
    %v794 = vunpack.c.l.b16 %v208
    %v795 = vunpack.c.h.b16 %v208
    %v796 = vunpack.c.l.b16 %v209
    %v797 = vunpack.c.h.b16 %v209
    %v798 = vunpack.c.l.b16 %v210
    %v799 = vunpack.c.h.b16 %v210
    %v800 = vunpack.c.l.b16 %v211
    %v801 = vunpack.c.h.b16 %v211
    %v802 = vunpack.c.l.b16 %v212
    %v803 = vunpack.c.h.b16 %v212
    %v804 = vunpack.c.l.b16 %v213
    %v805 = vunpack.c.h.b16 %v213
    %v806 = vunpack.c.l.b16 %v214
    %v807 = vunpack.c.h.b16 %v214
    %v808 = vunpack.c.l.b16 %v215
    %v809 = vunpack.c.h.b16 %v215
    %v810 = vunpack.c.l.b16 %v216
    %v811 = vunpack.c.h.b16 %v216
    %v812 = vunpack.c.l.b16 %v217
    %v813 = vunpack.c.h.b16 %v217
    %v814 = vunpack.c.l.b16 %v218
    %v815 = vunpack.c.h.b16 %v218
    %v816 = vunpack.c.l.b16 %v219
    %v817 = vunpack.c.h.b16 %v219
    %v818 = vunpack.c.l.b16 %v220
    %v819 = vunpack.c.h.b16 %v220
    %v820 = vunpack.c.l.b16 %v221
    %v821 = vunpack.c.h.b16 %v221
    %v822 = vunpack.c.l.b16 %v222
    %v823 = vunpack.c.h.b16 %v222
    %v824 = vunpack.c.l.b16 %v223
    %v825 = vunpack.c.h.b16 %v223
    %v826 = vunpack.c.l.b16 %v224
    %v827 = vunpack.c.h.b16 %v224
    %v828 = vunpack.c.l.b16 %v225
    %v829 = vunpack.c.h.b16 %v225
    %v830 = vunpack.c.l.b16 %v226
    %v831 = vunpack.c.h.b16 %v226
    %v832 = vunpack.c.l.b16 %v227
    %v833 = vunpack.c.h.b16 %v227
    %v834 = vunpack.c.l.b16 %v228
    %v835 = vunpack.c.h.b16 %v228
    %v836 = vunpack.c.l.b16 %v229
    %v837 = vunpack.c.h.b16 %v229
    %v838 = vunpack.c.l.b16 %v230
    %v839 = vunpack.c.h.b16 %v230
    %v840 = vunpack.c.l.b16 %v231
    %v841 = vunpack.c.h.b16 %v231
    %v842 = vpack.c.b16 %v454, %v450
    %v843 = vpack.c.b16 %v455, %v451
    %v844 = vpack.c.b16 %v456, %v452
    %v845 = vpack.c.b16 %v457, %v453
    %v846 = vpack.c.b16 %v462, %v458
    %v847 = vpack.c.b16 %v463, %v459
    %v848 = vpack.c.b16 %v464, %v460
    %v849 = vpack.c.b16 %v465, %v461
    %v850 = vpack.c.b16 %v470, %v466
    %v851 = vpack.c.b16 %v471, %v467
    %v852 = vpack.c.b16 %v472, %v468
    %v853 = vpack.c.b16 %v473, %v469
    %v854 = vpack.c.b16 %v478, %v474
    %v855 = vpack.c.b16 %v479, %v475
    %v856 = vpack.c.b16 %v480, %v476
    %v857 = vpack.c.b16 %v481, %v477
    %v858 = vpack.c.b16 %v486, %v482
    %v859 = vpack.c.b16 %v487, %v483
    %v860 = vpack.c.b16 %v488, %v484
    %v861 = vpack.c.b16 %v489, %v485
    %v862 = vpack.c.b16 %v494, %v490
    %v863 = vpack.c.b16 %v495, %v491
    %v864 = vpack.c.b16 %v496, %v492
    %v865 = vpack.c.b16 %v497, %v493
    %v866 = vpack.c.b16 %v502, %v498
    %v867 = vpack.c.b16 %v503, %v499
    %v868 = vpack.c.b16 %v504, %v500
    %v869 = vpack.c.b16 %v505, %v501
    %v870 = vpack.c.b16 %v510, %v506
    %v871 = vpack.c.b16 %v511, %v507
    %v872 = vpack.c.b16 %v512, %v508
    %v873 = vpack.c.b16 %v513, %v509
    %v874 = vpack.c.b16 %v518, %v514
    %v875 = vpack.c.b16 %v519, %v515
    %v876 = vpack.c.b16 %v520, %v516
    %v877 = vpack.c.b16 %v521, %v517
    %v878 = vpack.c.b16 %v526, %v522
    %v879 = vpack.c.b16 %v527, %v523
    %v880 = vpack.c.b16 %v528, %v524
    %v881 = vpack.c.b16 %v529, %v525
    %v882 = vpack.c.b16 %v534, %v530
    %v883 = vpack.c.b16 %v535, %v531
    %v884 = vpack.c.b16 %v536, %v532
    %v885 = vpack.c.b16 %v537, %v533
    %v886 = vpack.c.b16 %v542, %v538
    %v887 = vpack.c.b16 %v543, %v539
    %v888 = vpack.c.b16 %v544, %v540
    %v889 = vpack.c.b16 %v545, %v541
    %v890 = vpack.c.b16 %v550, %v546
    %v891 = vpack.c.b16 %v551, %v547
    %v892 = vpack.c.b16 %v552, %v548
    %v893 = vpack.c.b16 %v553, %v549
    %v894 = vpack.c.b16 %v558, %v554
    %v895 = vpack.c.b16 %v559, %v555
    %v896 = vpack.c.b16 %v560, %v556
    %v897 = vpack.c.b16 %v561, %v557
    %v898 = vpack.c.b16 %v566, %v562
    %v899 = vpack.c.b16 %v567, %v563
    %v900 = vpack.c.b16 %v568, %v564
    %v901 = vpack.c.b16 %v569, %v565
    %v902 = vpack.c.b16 %v574, %v570
    %v903 = vpack.c.b16 %v575, %v571
    %v904 = vpack.c.b16 %v576, %v572
    %v905 = vpack.c.b16 %v577, %v573
    %v906 = vpack.c.b16 %v582, %v578
    %v907 = vpack.c.b16 %v583, %v579
    %v908 = vpack.c.b16 %v584, %v580
    %v909 = vpack.c.b16 %v585, %v581
    %v910 = vpack.c.b16 %v590, %v586
    %v911 = vpack.c.b16 %v591, %v587
    %v912 = vpack.c.b16 %v592, %v588
    %v913 = vpack.c.b16 %v593, %v589
    %v914 = vpack.c.b16 %v598, %v594
    %v915 = vpack.c.b16 %v599, %v595
    %v916 = vpack.c.b16 %v600, %v596
    %v917 = vpack.c.b16 %v601, %v597
    %v918 = vpack.c.b16 %v606, %v602
    %v919 = vpack.c.b16 %v607, %v603
    %v920 = vpack.c.b16 %v608, %v604
    %v921 = vpack.c.b16 %v609, %v605
    %v922 = vpack.c.b16 %v614, %v610
    %v923 = vpack.c.b16 %v615, %v611
    %v924 = vpack.c.b16 %v616, %v612
    %v925 = vpack.c.b16 %v617, %v613
    %v926 = vpack.c.b16 %v622, %v618
    %v927 = vpack.c.b16 %v623, %v619
    %v928 = vpack.c.b16 %v624, %v620
    %v929 = vpack.c.b16 %v625, %v621
    %v930 = vpack.c.b16 %v630, %v626
    %v931 = vpack.c.b16 %v631, %v627
    %v932 = vpack.c.b16 %v632, %v628
    %v933 = vpack.c.b16 %v633, %v629
    %v934 = vpack.c.b16 %v638, %v634
    %v935 = vpack.c.b16 %v639, %v635
    %v936 = vpack.c.b16 %v640, %v636
    %v937 = vpack.c.b16 %v641, %v637
    %v938 = vpack.c.b16 %v646, %v642
    %v939 = vpack.c.b16 %v647, %v643
    %v940 = vpack.c.b16 %v648, %v644
    %v941 = vpack.c.b16 %v649, %v645
    %v942 = vpack.c.b16 %v654, %v650
    %v943 = vpack.c.b16 %v655, %v651
    %v944 = vpack.c.b16 %v656, %v652
    %v945 = vpack.c.b16 %v657, %v653
    %v946 = vpack.c.b16 %v662, %v658
    %v947 = vpack.c.b16 %v663, %v659
    %v948 = vpack.c.b16 %v664, %v660
    %v949 = vpack.c.b16 %v665, %v661
    %v950 = vpack.c.b16 %v670, %v666
    %v951 = vpack.c.b16 %v671, %v667
    %v952 = vpack.c.b16 %v672, %v668
    %v953 = vpack.c.b16 %v673, %v669
    %v954 = vpack.c.b16 %v678, %v674
    %v955 = vpack.c.b16 %v679, %v675
    %v956 = vpack.c.b16 %v680, %v676
    %v957 = vpack.c.b16 %v681, %v677
    %v958 = vpack.c.b16 %v686, %v682
    %v959 = vpack.c.b16 %v687, %v683
    %v960 = vpack.c.b16 %v688, %v684
    %v961 = vpack.c.b16 %v689, %v685
    %v962 = vpack.c.b16 %v694, %v690
    %v963 = vpack.c.b16 %v695, %v691
    %v964 = vpack.c.b16 %v696, %v692
    %v965 = vpack.c.b16 %v697, %v693
    %v966 = vpack.c.b16 %v702, %v698
    %v967 = vpack.c.b16 %v703, %v699
    %v968 = vpack.c.b16 %v704, %v700
    %v969 = vpack.c.b16 %v705, %v701
    %v970 = vpack.c.b16 %v710, %v706
    %v971 = vpack.c.b16 %v711, %v707
    %v972 = vpack.c.b16 %v712, %v708
    %v973 = vpack.c.b16 %v713, %v709
    %v974 = vpack.c.b16 %v718, %v714
    %v975 = vpack.c.b16 %v719, %v715
    %v976 = vpack.c.b16 %v720, %v716
    %v977 = vpack.c.b16 %v721, %v717
    %v978 = vpack.c.b16 %v726, %v722
    %v979 = vpack.c.b16 %v727, %v723
    %v980 = vpack.c.b16 %v728, %v724
    %v981 = vpack.c.b16 %v729, %v725
    %v982 = vpack.c.b16 %v734, %v730
    %v983 = vpack.c.b16 %v735, %v731
    %v984 = vpack.c.b16 %v736, %v732
    %v985 = vpack.c.b16 %v737, %v733
    %v986 = vpack.c.b16 %v742, %v738
    %v987 = vpack.c.b16 %v743, %v739
    %v988 = vpack.c.b16 %v744, %v740
    %v989 = vpack.c.b16 %v745, %v741
    %v990 = vpack.c.b16 %v750, %v746
    %v991 = vpack.c.b16 %v751, %v747
    %v992 = vpack.c.b16 %v752, %v748
    %v993 = vpack.c.b16 %v753, %v749
    %v994 = vpack.c.b16 %v758, %v754
    %v995 = vpack.c.b16 %v759, %v755
    %v996 = vpack.c.b16 %v760, %v756
    %v997 = vpack.c.b16 %v761, %v757
    %v998 = vpack.c.b16 %v766, %v762
    %v999 = vpack.c.b16 %v767, %v763
    %v1000 = vpack.c.b16 %v768, %v764
    %v1001 = vpack.c.b16 %v769, %v765
    %v1002 = vpack.c.b16 %v774, %v770
    %v1003 = vpack.c.b16 %v775, %v771
    %v1004 = vpack.c.b16 %v776, %v772
    %v1005 = vpack.c.b16 %v777, %v773
    %v1006 = vpack.c.b16 %v782, %v778
    %v1007 = vpack.c.b16 %v783, %v779
    %v1008 = vpack.c.b16 %v784, %v780
    %v1009 = vpack.c.b16 %v785, %v781
    %v1010 = vpack.c.b16 %v790, %v786
    %v1011 = vpack.c.b16 %v791, %v787
    %v1012 = vpack.c.b16 %v792, %v788
    %v1013 = vpack.c.b16 %v793, %v789
    %v1014 = vpack.c.b16 %v798, %v794
    %v1015 = vpack.c.b16 %v799, %v795
    %v1016 = vpack.c.b16 %v800, %v796
    %v1017 = vpack.c.b16 %v801, %v797
    %v1018 = vpack.c.b16 %v806, %v802
    %v1019 = vpack.c.b16 %v807, %v803
    %v1020 = vpack.c.b16 %v808, %v804
    %v1021 = vpack.c.b16 %v809, %v805
    %v1022 = vpack.c.b16 %v814, %v810
    %v1023 = vpack.c.b16 %v815, %v811
    %v1024 = vpack.c.b16 %v816, %v812
    %v1025 = vpack.c.b16 %v817, %v813
    %v1026 = vpack.c.b16 %v822, %v818
    %v1027 = vpack.c.b16 %v823, %v819
    %v1028 = vpack.c.b16 %v824, %v820
    %v1029 = vpack.c.b16 %v825, %v821
    %v1030 = vpack.c.b16 %v830, %v826
    %v1031 = vpack.c.b16 %v831, %v827
    %v1032 = vpack.c.b16 %v832, %v828
    %v1033 = vpack.c.b16 %v833, %v829
    %v1034 = vpack.c.b16 %v838, %v834
    %v1035 = vpack.c.b16 %v839, %v835
    %v1036 = vpack.c.b16 %v840, %v836
    %v1037 = vpack.c.b16 %v841, %v837
    %vm1234 = vcmask 130048
    %v1236 = vsel %vm1234, %v35, 0
    %1238 = vmatprep.subr.bf16.mxu0 %v843
    %1239 = vmatpush1.bf16.msra.mxu0 %v842
    %1240 = vmatprep.subr.bf16.mxu0 %v847
    %1241 = vmatpush1.bf16.msra.mxu0 %v846
    %1242 = vmatprep.subr.bf16.mxu0 %v851
    %1243 = vmatpush1.bf16.msra.mxu0 %v850
    %1244 = vmatprep.subr.bf16.mxu0 %v855
    %1245 = vmatpush1.bf16.msra.mxu0 %v854
    %1246 = vmatprep.subr.bf16.mxu0 %v859
    %1247 = vmatpush1.bf16.msra.mxu0 %v858
    %1248 = vmatprep.subr.bf16.mxu0 %v863
    %1249 = vmatpush1.bf16.msra.mxu0 %v862
    %1250 = vmatprep.subr.bf16.mxu0 %v867
    %1251 = vmatpush1.bf16.msra.mxu0 %v866
    %1252 = vmatprep.subr.bf16.mxu0 %v871
    %1253 = vmatpush1.bf16.msra.mxu0 %v870
    %1254 = vmatprep.subr.bf16.mxu0 %v875
    %1255 = vmatpush1.bf16.msra.mxu0 %v874
    %1256 = vmatprep.subr.bf16.mxu0 %v879
    %1257 = vmatpush1.bf16.msra.mxu0 %v878
    %1258 = vmatprep.subr.bf16.mxu0 %v883
    %1259 = vmatpush1.bf16.msra.mxu0 %v882
    %1260 = vmatprep.subr.bf16.mxu0 %v887
    %1261 = vmatpush1.bf16.msra.mxu0 %v886
    %1262 = vmatprep.subr.bf16.mxu0 %v891
    %1263 = vmatpush1.bf16.msra.mxu0 %v890
    %1264 = vmatprep.subr.bf16.mxu0 %v895
    %1265 = vmatpush1.bf16.msra.mxu0 %v894
    %1266 = vmatprep.subr.bf16.mxu0 %v899
    %1267 = vmatpush1.bf16.msra.mxu0 %v898
    %1268 = vmatprep.subr.bf16.mxu0 %v903
    %1269 = vmatpush1.bf16.msra.mxu0 %v902
    %1270 = vmatprep.mubr.bf16.mxu0 %v30
    %1271 = vmatmul.mubr.bf16.gmra.mrb[0].mxu0 %v29
    %v1272 = vpop.f32.mrb[0].mxu0
    %v1273 = vadd.f32 %v237, %v1272
    %v1274 = vpop.f32.mrb[0].mxu0
    %v1275 = vadd.f32 %v241, %v1274
    %v1276 = vpop.f32.mrb[0].mxu0
    %v1277 = vpop.f32.mrb[0].mxu0
    %1278 = vdwg.mxu0
    %1279 = vmatprep.subr.bf16.mxu0 %v907
    %1280 = vmatpush1.bf16.msra.mxu0 %v906
    %1281 = vmatprep.subr.bf16.mxu0 %v911
    %1282 = vmatpush1.bf16.msra.mxu0 %v910
    %1283 = vmatprep.subr.bf16.mxu0 %v915
    %1284 = vmatpush1.bf16.msra.mxu0 %v914
    %1285 = vmatprep.subr.bf16.mxu0 %v919
    %1286 = vmatpush1.bf16.msra.mxu0 %v918
    %1287 = vmatprep.subr.bf16.mxu0 %v923
    %1288 = vmatpush1.bf16.msra.mxu0 %v922
    %1289 = vmatprep.subr.bf16.mxu0 %v927
    %1290 = vmatpush1.bf16.msra.mxu0 %v926
    %1291 = vmatprep.subr.bf16.mxu0 %v931
    %1292 = vmatpush1.bf16.msra.mxu0 %v930
    %1293 = vmatprep.subr.bf16.mxu0 %v935
    %1294 = vmatpush1.bf16.msra.mxu0 %v934
    %1295 = vmatprep.subr.bf16.mxu0 %v939
    %1296 = vmatpush1.bf16.msra.mxu0 %v938
    %1297 = vmatprep.subr.bf16.mxu0 %v943
    %1298 = vmatpush1.bf16.msra.mxu0 %v942
    %1299 = vmatprep.subr.bf16.mxu0 %v947
    %1300 = vmatpush1.bf16.msra.mxu0 %v946
    %1301 = vmatprep.subr.bf16.mxu0 %v951
    %1302 = vmatpush1.bf16.msra.mxu0 %v950
    %1303 = vmatprep.subr.bf16.mxu0 %v955
    %1304 = vmatpush1.bf16.msra.mxu0 %v954
    %1305 = vmatprep.subr.bf16.mxu0 %v959
    %1306 = vmatpush1.bf16.msra.mxu0 %v958
    %1307 = vmatprep.subr.bf16.mxu0 %v963
    %1308 = vmatpush1.bf16.msra.mxu0 %v962
    %1309 = vmatprep.subr.bf16.mxu0 %v967
    %1310 = vmatpush1.bf16.msra.mxu0 %v966
    %1311 = vmatprep.mubr.bf16.mxu0 %v32
    %1312 = vmatmul.mubr.bf16.gmra.mrb[0].mxu0 %v31
    %v1313 = vpop.f32.mrb[0].mxu0
    %v1314 = vadd.f32 %v1273, %v1313
    %v1315 = vpop.f32.mrb[0].mxu0
    %v1316 = vadd.f32 %v1275, %v1315
    %v1317 = vpop.f32.mrb[0].mxu0
    %v1318 = vpop.f32.mrb[0].mxu0
    %1319 = vdwg.mxu0
    %1320 = vmatprep.subr.bf16.mxu0 %v971
    %1321 = vmatpush1.bf16.msra.mxu0 %v970
    %1322 = vmatprep.subr.bf16.mxu0 %v975
    %1323 = vmatpush1.bf16.msra.mxu0 %v974
    %1324 = vmatprep.subr.bf16.mxu0 %v979
    %1325 = vmatpush1.bf16.msra.mxu0 %v978
    %1326 = vmatprep.subr.bf16.mxu0 %v983
    %1327 = vmatpush1.bf16.msra.mxu0 %v982
    %1328 = vmatprep.subr.bf16.mxu0 %v987
    %1329 = vmatpush1.bf16.msra.mxu0 %v986
    %1330 = vmatprep.subr.bf16.mxu0 %v991
    %1331 = vmatpush1.bf16.msra.mxu0 %v990
    %1332 = vmatprep.subr.bf16.mxu0 %v995
    %1333 = vmatpush1.bf16.msra.mxu0 %v994
    %1334 = vmatprep.subr.bf16.mxu0 %v999
    %1335 = vmatpush1.bf16.msra.mxu0 %v998
    %1336 = vmatprep.subr.bf16.mxu0 %v1003
    %1337 = vmatpush1.bf16.msra.mxu0 %v1002
    %1338 = vmatprep.subr.bf16.mxu0 %v1007
    %1339 = vmatpush1.bf16.msra.mxu0 %v1006
    %1340 = vmatprep.subr.bf16.mxu0 %v1011
    %1341 = vmatpush1.bf16.msra.mxu0 %v1010
    %1342 = vmatprep.subr.bf16.mxu0 %v1015
    %1343 = vmatpush1.bf16.msra.mxu0 %v1014
    %1344 = vmatprep.subr.bf16.mxu0 %v1019
    %1345 = vmatpush1.bf16.msra.mxu0 %v1018
    %1346 = vmatprep.subr.bf16.mxu0 %v1023
    %1347 = vmatpush1.bf16.msra.mxu0 %v1022
    %1348 = vmatprep.subr.bf16.mxu0 %v1027
    %1349 = vmatpush1.bf16.msra.mxu0 %v1026
    %1350 = vmatprep.subr.bf16.mxu0 %v1031
    %1351 = vmatpush1.bf16.msra.mxu0 %v1030
    %1352 = vmatprep.mubr.bf16.mxu0 %v34
    %1353 = vmatmul.mubr.bf16.gmra.mrb[0].mxu0 %v33
    %v1354 = vpop.f32.mrb[0].mxu0
    %v1355 = vadd.f32 %v1314, %v1354
    %v1356 = vpop.f32.mrb[0].mxu0
    %v1357 = vadd.f32 %v1316, %v1356
    %v1358 = vpop.f32.mrb[0].mxu0
    %v1359 = vpop.f32.mrb[0].mxu0
    %1360 = vdwg.mxu0
    %1361 = vmatprep.subr.bf16.mxu0 %v1035
    %1362 = vmatpush1.bf16.msra.mxu0 %v1034
    %1363 = vmatprep.subr.bf16.mxu0 0
    %1364 = vmatpush1.bf16.msra.mxu0 0
    %1365 = vmatprep.subr.bf16.mxu0 0
    %1366 = vmatpush1.bf16.msra.mxu0 0
    %1367 = vmatprep.subr.bf16.mxu0 0
    %1368 = vmatpush1.bf16.msra.mxu0 0
    %1369 = vmatprep.subr.bf16.mxu0 0
    %1370 = vmatpush1.bf16.msra.mxu0 0
    %1371 = vmatprep.subr.bf16.mxu0 0
    %1372 = vmatpush1.bf16.msra.mxu0 0
    %1373 = vmatprep.subr.bf16.mxu0 0
    %1374 = vmatpush1.bf16.msra.mxu0 0
    %1375 = vmatprep.subr.bf16.mxu0 0
    %1376 = vmatpush1.bf16.msra.mxu0 0
    %1377 = vmatprep.subr.bf16.mxu0 0
    %1378 = vmatpush1.bf16.msra.mxu0 0
    %1379 = vmatprep.subr.bf16.mxu0 0
    %1380 = vmatpush1.bf16.msra.mxu0 0
    %1381 = vmatprep.subr.bf16.mxu0 0
    %1382 = vmatpush1.bf16.msra.mxu0 0
    %1383 = vmatprep.subr.bf16.mxu0 0
    %1384 = vmatpush1.bf16.msra.mxu0 0
    %1385 = vmatprep.subr.bf16.mxu0 0
    %1386 = vmatpush1.bf16.msra.mxu0 0
    %1387 = vmatprep.subr.bf16.mxu0 0
    %1388 = vmatpush1.bf16.msra.mxu0 0
    %1389 = vmatprep.subr.bf16.mxu0 0
    %1390 = vmatpush1.bf16.msra.mxu0 0
    %1391 = vmatprep.subr.bf16.mxu0 0
    %1392 = vmatpush1.bf16.msra.mxu0 0
    %1393 = vmatprep.mubr.bf16.mxu0 0
    %1394 = vmatmul.mubr.bf16.gmra.mrb[0].mxu0 %v1236
    %v1395 = vpop.f32.mrb[0].mxu0
    %v1396 = vadd.f32 %v1355, %v1395
    %v1397 = vpop.f32.mrb[0].mxu0
    %v1398 = vadd.f32 %v1357, %v1397
    %v1399 = vpop.f32.mrb[0].mxu0
    %v1400 = vpop.f32.mrb[0].mxu0
    %1401 = vdwg.mxu0
    %1402 = vmatprep.subr.bf16.mxu0 %v845
    %1403 = vmatpush1.bf16.msra.mxu0 %v844
    %1404 = vmatprep.subr.bf16.mxu0 %v849
    %1405 = vmatpush1.bf16.msra.mxu0 %v848
    %1406 = vmatprep.subr.bf16.mxu0 %v853
    %1407 = vmatpush1.bf16.msra.mxu0 %v852
    %1408 = vmatprep.subr.bf16.mxu0 %v857
    %1409 = vmatpush1.bf16.msra.mxu0 %v856
    %1410 = vmatprep.subr.bf16.mxu0 %v861
    %1411 = vmatpush1.bf16.msra.mxu0 %v860
    %1412 = vmatprep.subr.bf16.mxu0 %v865
    %1413 = vmatpush1.bf16.msra.mxu0 %v864
    %1414 = vmatprep.subr.bf16.mxu0 %v869
    %1415 = vmatpush1.bf16.msra.mxu0 %v868
    %1416 = vmatprep.subr.bf16.mxu0 %v873
    %1417 = vmatpush1.bf16.msra.mxu0 %v872
    %1418 = vmatprep.subr.bf16.mxu0 %v877
    %1419 = vmatpush1.bf16.msra.mxu0 %v876
    %1420 = vmatprep.subr.bf16.mxu0 %v881
    %1421 = vmatpush1.bf16.msra.mxu0 %v880
    %1422 = vmatprep.subr.bf16.mxu0 %v885
    %1423 = vmatpush1.bf16.msra.mxu0 %v884
    %1424 = vmatprep.subr.bf16.mxu0 %v889
    %1425 = vmatpush1.bf16.msra.mxu0 %v888
    %1426 = vmatprep.subr.bf16.mxu0 %v893
    %1427 = vmatpush1.bf16.msra.mxu0 %v892
    %1428 = vmatprep.subr.bf16.mxu0 %v897
    %1429 = vmatpush1.bf16.msra.mxu0 %v896
    %1430 = vmatprep.subr.bf16.mxu0 %v901
    %1431 = vmatpush1.bf16.msra.mxu0 %v900
    %1432 = vmatprep.subr.bf16.mxu0 %v905
    %1433 = vmatpush1.bf16.msra.mxu0 %v904
    %1434 = vmatprep.mubr.bf16.mxu0 %v30
    %1435 = vmatmul.mubr.bf16.gmra.mrb[0].mxu0 %v29
    %v1436 = vpop.f32.mrb[0].mxu0
    %v1437 = vadd.f32 %v245, %v1436
    %v1438 = vpop.f32.mrb[0].mxu0
    %v1439 = vadd.f32 %v249, %v1438
    %v1440 = vpop.f32.mrb[0].mxu0
    %v1441 = vpop.f32.mrb[0].mxu0
    %1442 = vdwg.mxu0
    %1443 = vmatprep.subr.bf16.mxu0 %v909
    %1444 = vmatpush1.bf16.msra.mxu0 %v908
    %1445 = vmatprep.subr.bf16.mxu0 %v913
    %1446 = vmatpush1.bf16.msra.mxu0 %v912
    %1447 = vmatprep.subr.bf16.mxu0 %v917
    %1448 = vmatpush1.bf16.msra.mxu0 %v916
    %1449 = vmatprep.subr.bf16.mxu0 %v921
    %1450 = vmatpush1.bf16.msra.mxu0 %v920
    %1451 = vmatprep.subr.bf16.mxu0 %v925
    %1452 = vmatpush1.bf16.msra.mxu0 %v924
    %1453 = vmatprep.subr.bf16.mxu0 %v929
    %1454 = vmatpush1.bf16.msra.mxu0 %v928
    %1455 = vmatprep.subr.bf16.mxu0 %v933
    %1456 = vmatpush1.bf16.msra.mxu0 %v932
    %1457 = vmatprep.subr.bf16.mxu0 %v937
    %1458 = vmatpush1.bf16.msra.mxu0 %v936
    %1459 = vmatprep.subr.bf16.mxu0 %v941
    %1460 = vmatpush1.bf16.msra.mxu0 %v940
    %1461 = vmatprep.subr.bf16.mxu0 %v945
    %1462 = vmatpush1.bf16.msra.mxu0 %v944
    %1463 = vmatprep.subr.bf16.mxu0 %v949
    %1464 = vmatpush1.bf16.msra.mxu0 %v948
    %1465 = vmatprep.subr.bf16.mxu0 %v953
    %1466 = vmatpush1.bf16.msra.mxu0 %v952
    %1467 = vmatprep.subr.bf16.mxu0 %v957
    %1468 = vmatpush1.bf16.msra.mxu0 %v956
    %1469 = vmatprep.subr.bf16.mxu0 %v961
    %1470 = vmatpush1.bf16.msra.mxu0 %v960
    %1471 = vmatprep.subr.bf16.mxu0 %v965
    %1472 = vmatpush1.bf16.msra.mxu0 %v964
    %1473 = vmatprep.subr.bf16.mxu0 %v969
    %1474 = vmatpush1.bf16.msra.mxu0 %v968
    %1475 = vmatprep.mubr.bf16.mxu0 %v32
    %1476 = vmatmul.mubr.bf16.gmra.mrb[0].mxu0 %v31
    %v1477 = vpop.f32.mrb[0].mxu0
    %v1478 = vadd.f32 %v1437, %v1477
    %v1479 = vpop.f32.mrb[0].mxu0
    %v1480 = vadd.f32 %v1439, %v1479
    %v1481 = vpop.f32.mrb[0].mxu0
    %v1482 = vpop.f32.mrb[0].mxu0
    %1483 = vdwg.mxu0
    %1484 = vmatprep.subr.bf16.mxu0 %v973
    %1485 = vmatpush1.bf16.msra.mxu0 %v972
    %1486 = vmatprep.subr.bf16.mxu0 %v977
    %1487 = vmatpush1.bf16.msra.mxu0 %v976
    %1488 = vmatprep.subr.bf16.mxu0 %v981
    %1489 = vmatpush1.bf16.msra.mxu0 %v980
    %1490 = vmatprep.subr.bf16.mxu0 %v985
    %1491 = vmatpush1.bf16.msra.mxu0 %v984
    %1492 = vmatprep.subr.bf16.mxu0 %v989
    %1493 = vmatpush1.bf16.msra.mxu0 %v988
    %1494 = vmatprep.subr.bf16.mxu0 %v993
    %1495 = vmatpush1.bf16.msra.mxu0 %v992
    %1496 = vmatprep.subr.bf16.mxu0 %v997
    %1497 = vmatpush1.bf16.msra.mxu0 %v996
    %1498 = vmatprep.subr.bf16.mxu0 %v1001
    %1499 = vmatpush1.bf16.msra.mxu0 %v1000
    %1500 = vmatprep.subr.bf16.mxu0 %v1005
    %1501 = vmatpush1.bf16.msra.mxu0 %v1004
    %1502 = vmatprep.subr.bf16.mxu0 %v1009
    %1503 = vmatpush1.bf16.msra.mxu0 %v1008
    %1504 = vmatprep.subr.bf16.mxu0 %v1013
    %1505 = vmatpush1.bf16.msra.mxu0 %v1012
    %1506 = vmatprep.subr.bf16.mxu0 %v1017
    %1507 = vmatpush1.bf16.msra.mxu0 %v1016
    %1508 = vmatprep.subr.bf16.mxu0 %v1021
    %1509 = vmatpush1.bf16.msra.mxu0 %v1020
    %1510 = vmatprep.subr.bf16.mxu0 %v1025
    %1511 = vmatpush1.bf16.msra.mxu0 %v1024
    %1512 = vmatprep.subr.bf16.mxu0 %v1029
    %1513 = vmatpush1.bf16.msra.mxu0 %v1028
    %1514 = vmatprep.subr.bf16.mxu0 %v1033
    %1515 = vmatpush1.bf16.msra.mxu0 %v1032
    %1516 = vmatprep.mubr.bf16.mxu0 %v34
    %1517 = vmatmul.mubr.bf16.gmra.mrb[0].mxu0 %v33
    %v1518 = vpop.f32.mrb[0].mxu0
    %v1519 = vadd.f32 %v1478, %v1518
    %v1520 = vpop.f32.mrb[0].mxu0
    %v1521 = vadd.f32 %v1480, %v1520
    %v1522 = vpop.f32.mrb[0].mxu0
    %v1523 = vpop.f32.mrb[0].mxu0
    %1524 = vdwg.mxu0
    %1525 = vmatprep.subr.bf16.mxu0 %v1037
    %1526 = vmatpush1.bf16.msra.mxu0 %v1036
    %1527 = vmatprep.subr.bf16.mxu0 0
    %1528 = vmatpush1.bf16.msra.mxu0 0
    %1529 = vmatprep.subr.bf16.mxu0 0
    %1530 = vmatpush1.bf16.msra.mxu0 0
    %1531 = vmatprep.subr.bf16.mxu0 0
    %1532 = vmatpush1.bf16.msra.mxu0 0
    %1533 = vmatprep.subr.bf16.mxu0 0
    %1534 = vmatpush1.bf16.msra.mxu0 0
    %1535 = vmatprep.subr.bf16.mxu0 0
    %1536 = vmatpush1.bf16.msra.mxu0 0
    %1537 = vmatprep.subr.bf16.mxu0 0
    %1538 = vmatpush1.bf16.msra.mxu0 0
    %1539 = vmatprep.subr.bf16.mxu0 0
    %1540 = vmatpush1.bf16.msra.mxu0 0
    %1541 = vmatprep.subr.bf16.mxu0 0
    %1542 = vmatpush1.bf16.msra.mxu0 0
    %1543 = vmatprep.subr.bf16.mxu0 0
    %1544 = vmatpush1.bf16.msra.mxu0 0
    %1545 = vmatprep.subr.bf16.mxu0 0
    %1546 = vmatpush1.bf16.msra.mxu0 0
    %1547 = vmatprep.subr.bf16.mxu0 0
    %1548 = vmatpush1.bf16.msra.mxu0 0
    %1549 = vmatprep.subr.bf16.mxu0 0
    %1550 = vmatpush1.bf16.msra.mxu0 0
    %1551 = vmatprep.subr.bf16.mxu0 0
    %1552 = vmatpush1.bf16.msra.mxu0 0
    %1553 = vmatprep.subr.bf16.mxu0 0
    %1554 = vmatpush1.bf16.msra.mxu0 0
    %1555 = vmatprep.subr.bf16.mxu0 0
    %1556 = vmatpush1.bf16.msra.mxu0 0
    %1557 = vmatprep.mubr.bf16.mxu0 0
    %1558 = vmatmul.mubr.bf16.gmra.mrb[0].mxu0 %v1236
    %v1559 = vpop.f32.mrb[0].mxu0
    %v1560 = vadd.f32 %v1519, %v1559
    %v1561 = vpop.f32.mrb[0].mxu0
    %v1562 = vadd.f32 %v1521, %v1561
    %v1563 = vpop.f32.mrb[0].mxu0
    %v1564 = vpop.f32.mrb[0].mxu0
    %1565 = vdwg.mxu0
    %v1566 = vtanh.pop %v1396
    %v1567 = vtanh.pop %v1398
    %v1568 = vtanh.pop %v1560
    %v1569 = vtanh.pop %v1562
    %v1570 = vpack.c.bf16 %v1566, %v1566
    %v1571 = vpack.c.bf16 %v1567, %v1567
    %v1572 = vpack.c.bf16 %v1568, %v1568
    %v1573 = vpack.c.bf16 %v1569, %v1569
    %v1574 = vld [vmem:[%s3] sm:$0xff]
    %v1575 = vld [vmem:[%s3 + $0x8] sm:$0xff]
    %v1576 = vld [vmem:[%s3 + $0x10] sm:$0xff]
    %v1577 = vld [vmem:[%s3 + $0x18] sm:$0xf]
    %v1578 = vld [vmem:[%s3 + $0x1c] sm:$0xff]
    %v1579 = vld [vmem:[%s3 + $0x24] sm:$0xff]
    %v1580 = vld [vmem:[%s3 + $0x2c] sm:$0xff]
    %v1581 = vld [vmem:[%s3 + $0x34] sm:$0xf]
    %v1582 = vld [vmem:[%s3 + $0x38] sm:$0xff]
    %v1583 = vld [vmem:[%s3 + $0x40] sm:$0xff]
    %v1584 = vld [vmem:[%s3 + $0x48] sm:$0xff]
    %v1585 = vld [vmem:[%s3 + $0x50] sm:$0xf]
    %v1586 = vld [vmem:[%s3 + $0x54] sm:$0xff]
    %v1587 = vld [vmem:[%s3 + $0x5c] sm:$0xff]
    %v1588 = vld [vmem:[%s3 + $0x64] sm:$0xff]
    %v1589 = vld [vmem:[%s3 + $0x6c] sm:$0xf]
    %v1590 = vld [vmem:[%s3 + $0x70] sm:$0xff]
    %v1591 = vld [vmem:[%s3 + $0x78] sm:$0xff]
    %v1592 = vld [vmem:[%s3 + $0x80] sm:$0xff]
    %v1593 = vld [vmem:[%s3 + $0x88] sm:$0xf]
    %v1594 = vld [vmem:[%s3 + $0x8c] sm:$0xff]
    %v1595 = vld [vmem:[%s3 + $0x94] sm:$0xff]
    %v1596 = vld [vmem:[%s3 + $0x9c] sm:$0xff]
    %v1597 = vld [vmem:[%s3 + $0xa4] sm:$0xf]
    %v1598 = vld [vmem:[%s3 + $0xa8] sm:$0xff]
    %v1599 = vld [vmem:[%s3 + $0xb0] sm:$0xff]
    %v1600 = vld [vmem:[%s3 + $0xb8] sm:$0xff]
    %v1601 = vld [vmem:[%s3 + $0xc0] sm:$0xf]
    %v1602 = vld [vmem:[%s3 + $0xc4] sm:$0xff]
    %v1603 = vld [vmem:[%s3 + $0xcc] sm:$0xff]
    %v1604 = vld [vmem:[%s3 + $0xd4] sm:$0xff]
    %v1605 = vld [vmem:[%s3 + $0xdc] sm:$0xf]
    %v1606 = vld [vmem:[%s3 + $0xe0] sm:$0xff]
    %v1607 = vld [vmem:[%s3 + $0xe8] sm:$0xff]
    %v1608 = vld [vmem:[%s3 + $0xf0] sm:$0xff]
    %v1609 = vld [vmem:[%s3 + $0xf8] sm:$0xf]
    %v1610 = vld [vmem:[%s3 + $0xfc] sm:$0xff]
    %v1611 = vld [vmem:[%s3 + $0x104] sm:$0xff]
    %v1612 = vld [vmem:[%s3 + $0x10c] sm:$0xff]
    %v1613 = vld [vmem:[%s3 + $0x114] sm:$0xf]
    %v1614 = vld [vmem:[%s3 + $0x118] sm:$0xff]
    %v1615 = vld [vmem:[%s3 + $0x120] sm:$0xff]
    %v1616 = vld [vmem:[%s3 + $0x128] sm:$0xff]
    %v1617 = vld [vmem:[%s3 + $0x130] sm:$0xf]
    %v1618 = vld [vmem:[%s3 + $0x134] sm:$0xff]
    %v1619 = vld [vmem:[%s3 + $0x13c] sm:$0xff]
    %v1620 = vld [vmem:[%s3 + $0x144] sm:$0xff]
    %v1621 = vld [vmem:[%s3 + $0x14c] sm:$0xf]
    %v1622 = vld [vmem:[%s3 + $0x150] sm:$0xff]
    %v1623 = vld [vmem:[%s3 + $0x158] sm:$0xff]
    %v1624 = vld [vmem:[%s3 + $0x160] sm:$0xff]
    %v1625 = vld [vmem:[%s3 + $0x168] sm:$0xf]
    %v1626 = vld [vmem:[%s3 + $0x16c] sm:$0xff]
    %v1627 = vld [vmem:[%s3 + $0x174] sm:$0xff]
    %v1628 = vld [vmem:[%s3 + $0x17c] sm:$0xff]
    %v1629 = vld [vmem:[%s3 + $0x184] sm:$0xf]
    %v1630 = vld [vmem:[%s3 + $0x188] sm:$0xff]
    %v1631 = vld [vmem:[%s3 + $0x190] sm:$0xff]
    %v1632 = vld [vmem:[%s3 + $0x198] sm:$0xff]
    %v1633 = vld [vmem:[%s3 + $0x1a0] sm:$0xf]
    %v1634 = vld [vmem:[%s3 + $0x1a4] sm:$0xff]
    %v1635 = vld [vmem:[%s3 + $0x1ac] sm:$0xff]
    %v1636 = vld [vmem:[%s3 + $0x1b4] sm:$0xff]
    %v1637 = vld [vmem:[%s3 + $0x1bc] sm:$0xf]
    %v1638 = vld [vmem:[%s3 + $0x1c0] sm:$0xff]
    %v1639 = vld [vmem:[%s3 + $0x1c8] sm:$0xff]
    %v1640 = vld [vmem:[%s3 + $0x1d0] sm:$0xff]
    %v1641 = vld [vmem:[%s3 + $0x1d8] sm:$0xf]
    %v1642 = vld [vmem:[%s3 + $0x1dc] sm:$0xff]
    %v1643 = vld [vmem:[%s3 + $0x1e4] sm:$0xff]
    %v1644 = vld [vmem:[%s3 + $0x1ec] sm:$0xff]
    %v1645 = vld [vmem:[%s3 + $0x1f4] sm:$0xf]
    %v1646 = vld [vmem:[%s3 + $0x1f8] sm:$0xff]
    %v1647 = vld [vmem:[%s3 + $0x200] sm:$0xff]
    %v1648 = vld [vmem:[%s3 + $0x208] sm:$0xff]
    %v1649 = vld [vmem:[%s3 + $0x210] sm:$0xf]
    %v1650 = vld [vmem:[%s3 + $0x214] sm:$0xff]
    %v1651 = vld [vmem:[%s3 + $0x21c] sm:$0xff]
    %v1652 = vld [vmem:[%s3 + $0x224] sm:$0xff]
    %v1653 = vld [vmem:[%s3 + $0x22c] sm:$0xf]
    %v1654 = vld [vmem:[%s3 + $0x230] sm:$0xff]
    %v1655 = vld [vmem:[%s3 + $0x238] sm:$0xff]
    %v1656 = vld [vmem:[%s3 + $0x240] sm:$0xff]
    %v1657 = vld [vmem:[%s3 + $0x248] sm:$0xf]
    %v1658 = vld [vmem:[%s3 + $0x24c] sm:$0xff]
    %v1659 = vld [vmem:[%s3 + $0x254] sm:$0xff]
    %v1660 = vld [vmem:[%s3 + $0x25c] sm:$0xff]
    %v1661 = vld [vmem:[%s3 + $0x264] sm:$0xf]
    %v1662 = vld [vmem:[%s3 + $0x268] sm:$0xff]
    %v1663 = vld [vmem:[%s3 + $0x270] sm:$0xff]
    %v1664 = vld [vmem:[%s3 + $0x278] sm:$0xff]
    %v1665 = vld [vmem:[%s3 + $0x280] sm:$0xf]
    %v1666 = vld [vmem:[%s3 + $0x284] sm:$0xff]
    %v1667 = vld [vmem:[%s3 + $0x28c] sm:$0xff]
    %v1668 = vld [vmem:[%s3 + $0x294] sm:$0xff]
    %v1669 = vld [vmem:[%s3 + $0x29c] sm:$0xf]
    %v1670 = vld [vmem:[%s3 + $0x2a0] sm:$0xff]
    %v1671 = vld [vmem:[%s3 + $0x2a8] sm:$0xff]
    %v1672 = vld [vmem:[%s3 + $0x2b0] sm:$0xff]
    %v1673 = vld [vmem:[%s3 + $0x2b8] sm:$0xf]
    %v1674 = vld [vmem:[%s3 + $0x2bc] sm:$0xff]
    %v1675 = vld [vmem:[%s3 + $0x2c4] sm:$0xff]
    %v1676 = vld [vmem:[%s3 + $0x2cc] sm:$0xff]
    %v1677 = vld [vmem:[%s3 + $0x2d4] sm:$0xf]
    %v1678 = vld [vmem:[%s3 + $0x2d8] sm:$0xff]
    %v1679 = vld [vmem:[%s3 + $0x2e0] sm:$0xff]
    %v1680 = vld [vmem:[%s3 + $0x2e8] sm:$0xff]
    %v1681 = vld [vmem:[%s3 + $0x2f0] sm:$0xf]
    %v1682 = vld [vmem:[%s3 + $0x2f4] sm:$0xff]
    %v1683 = vld [vmem:[%s3 + $0x2fc] sm:$0xff]
    %v1684 = vld [vmem:[%s3 + $0x304] sm:$0xff]
    %v1685 = vld [vmem:[%s3 + $0x30c] sm:$0xf]
    %v1686 = vld [vmem:[%s3 + $0x310] sm:$0xff]
    %v1687 = vld [vmem:[%s3 + $0x318] sm:$0xff]
    %v1688 = vld [vmem:[%s3 + $0x320] sm:$0xff]
    %v1689 = vld [vmem:[%s3 + $0x328] sm:$0xf]
    %v1690 = vld [vmem:[%s3 + $0x32c] sm:$0xff]
    %v1691 = vld [vmem:[%s3 + $0x334] sm:$0xff]
    %v1692 = vld [vmem:[%s3 + $0x33c] sm:$0xff]
    %v1693 = vld [vmem:[%s3 + $0x344] sm:$0xf]
    %v1694 = vld [vmem:[%s3 + $0x348] sm:$0xff]
    %v1695 = vld [vmem:[%s3 + $0x350] sm:$0xff]
    %v1696 = vld [vmem:[%s3 + $0x358] sm:$0xff]
    %v1697 = vld [vmem:[%s3 + $0x360] sm:$0xf]
    %v1698 = vld [vmem:[%s3 + $0x364] sm:$0xff]
    %v1699 = vld [vmem:[%s3 + $0x36c] sm:$0xff]
    %v1700 = vld [vmem:[%s3 + $0x374] sm:$0xff]
    %v1701 = vld [vmem:[%s3 + $0x37c] sm:$0xf]
    %v1702 = vld [vmem:[%s3 + $0x380] sm:$0xff]
    %v1703 = vld [vmem:[%s3 + $0x388] sm:$0xff]
    %v1704 = vld [vmem:[%s3 + $0x390] sm:$0xff]
    %v1705 = vld [vmem:[%s3 + $0x398] sm:$0xf]
    %v1706 = vld [vmem:[%s3 + $0x39c] sm:$0xff]
    %v1707 = vld [vmem:[%s3 + $0x3a4] sm:$0xff]
    %v1708 = vld [vmem:[%s3 + $0x3ac] sm:$0xff]
    %v1709 = vld [vmem:[%s3 + $0x3b4] sm:$0xf]
    %v1710 = vld [vmem:[%s3 + $0x3b8] sm:$0xff]
    %v1711 = vld [vmem:[%s3 + $0x3c0] sm:$0xff]
    %v1712 = vld [vmem:[%s3 + $0x3c8] sm:$0xff]
    %v1713 = vld [vmem:[%s3 + $0x3d0] sm:$0xf]
    %v1714 = vld [vmem:[%s3 + $0x3d4] sm:$0xff]
    %v1715 = vld [vmem:[%s3 + $0x3dc] sm:$0xff]
    %v1716 = vld [vmem:[%s3 + $0x3e4] sm:$0xff]
    %v1717 = vld [vmem:[%s3 + $0x3ec] sm:$0xf]
    %v1718 = vld [vmem:[%s3 + $0x3f0] sm:$0xff]
    %v1719 = vld [vmem:[%s3 + $0x3f8] sm:$0xff]
    %v1720 = vld [vmem:[%s3 + $0x400] sm:$0xff]
    %v1721 = vld [vmem:[%s3 + $0x408] sm:$0xf]
    %v1722 = vld [vmem:[%s3 + $0x40c] sm:$0xff]
    %v1723 = vld [vmem:[%s3 + $0x414] sm:$0xff]
    %v1724 = vld [vmem:[%s3 + $0x41c] sm:$0xff]
    %v1725 = vld [vmem:[%s3 + $0x424] sm:$0xf]
    %v1726 = vld [vmem:[%s3 + $0x428] sm:$0xff]
    %v1727 = vld [vmem:[%s3 + $0x430] sm:$0xff]
    %v1728 = vld [vmem:[%s3 + $0x438] sm:$0xff]
    %v1729 = vld [vmem:[%s3 + $0x440] sm:$0xf]
    %v1730 = vld [vmem:[%s3 + $0x444] sm:$0xff]
    %v1731 = vld [vmem:[%s3 + $0x44c] sm:$0xff]
    %v1732 = vld [vmem:[%s3 + $0x454] sm:$0xff]
    %v1733 = vld [vmem:[%s3 + $0x45c] sm:$0xf]
    %v1734 = vld [vmem:[%s3 + $0x460] sm:$0xff]
    %v1735 = vld [vmem:[%s3 + $0x468] sm:$0xff]
    %v1736 = vld [vmem:[%s3 + $0x470] sm:$0xff]
    %v1737 = vld [vmem:[%s3 + $0x478] sm:$0xf]
    %v1738 = vld [vmem:[%s3 + $0x47c] sm:$0xff]
    %v1739 = vld [vmem:[%s3 + $0x484] sm:$0xff]
    %v1740 = vld [vmem:[%s3 + $0x48c] sm:$0xff]
    %v1741 = vld [vmem:[%s3 + $0x494] sm:$0xf]
    %v1742 = vld [vmem:[%s3 + $0x498] sm:$0xff]
    %v1743 = vld [vmem:[%s3 + $0x4a0] sm:$0xff]
    %v1744 = vld [vmem:[%s3 + $0x4a8] sm:$0xff]
    %v1745 = vld [vmem:[%s3 + $0x4b0] sm:$0xf]
    %v1746 = vld [vmem:[%s3 + $0x4b4] sm:$0xff]
    %v1747 = vld [vmem:[%s3 + $0x4bc] sm:$0xff]
    %v1748 = vld [vmem:[%s3 + $0x4c4] sm:$0xff]
    %v1749 = vld [vmem:[%s3 + $0x4cc] sm:$0xf]
    %v1750 = vld [vmem:[%s3 + $0x4d0] sm:$0xff]
    %v1751 = vld [vmem:[%s3 + $0x4d8] sm:$0xff]
    %v1752 = vld [vmem:[%s3 + $0x4e0] sm:$0xff]
    %v1753 = vld [vmem:[%s3 + $0x4e8] sm:$0xf]
    %v1754 = vld [vmem:[%s3 + $0x4ec] sm:$0xff]
    %v1755 = vld [vmem:[%s3 + $0x4f4] sm:$0xff]
    %v1756 = vld [vmem:[%s3 + $0x4fc] sm:$0xff]
    %v1757 = vld [vmem:[%s3 + $0x504] sm:$0xf]
    %v1758 = vld [vmem:[%s3 + $0x508] sm:$0xff]
    %v1759 = vld [vmem:[%s3 + $0x510] sm:$0xff]
    %v1760 = vld [vmem:[%s3 + $0x518] sm:$0xff]
    %v1761 = vld [vmem:[%s3 + $0x520] sm:$0xf]
    %v1762 = vld [vmem:[%s3 + $0x524] sm:$0xff]
    %v1763 = vld [vmem:[%s3 + $0x52c] sm:$0xff]
    %v1764 = vld [vmem:[%s3 + $0x534] sm:$0xff]
    %v1765 = vld [vmem:[%s3 + $0x53c] sm:$0xf]
    %v1766 = vld [vmem:[%s3 + $0x540] sm:$0xff]
    %v1767 = vld [vmem:[%s3 + $0x548] sm:$0xff]
    %v1768 = vld [vmem:[%s3 + $0x550] sm:$0xff]
    %v1769 = vld [vmem:[%s3 + $0x558] sm:$0xf]
    %v1770 = vld [vmem:[%s3 + $0x55c] sm:$0xff]
    %v1771 = vld [vmem:[%s3 + $0x564] sm:$0xff]
    %v1772 = vld [vmem:[%s3 + $0x56c] sm:$0xff]
    %v1773 = vld [vmem:[%s3 + $0x574] sm:$0xf]
    %v1774 = vld [vmem:[%s3 + $0x578] sm:$0xff]
    %v1775 = vld [vmem:[%s3 + $0x580] sm:$0xff]
    %v1776 = vld [vmem:[%s3 + $0x588] sm:$0xff]
    %v1777 = vld [vmem:[%s3 + $0x590] sm:$0xf]
    %v1778 = vld [vmem:[%s3 + $0x594] sm:$0xff]
    %v1779 = vld [vmem:[%s3 + $0x59c] sm:$0xff]
    %v1780 = vld [vmem:[%s3 + $0x5a4] sm:$0xff]
    %v1781 = vld [vmem:[%s3 + $0x5ac] sm:$0xf]
    %v1782 = vld [vmem:[%s3 + $0x5b0] sm:$0xff]
    %v1783 = vld [vmem:[%s3 + $0x5b8] sm:$0xff]
    %v1784 = vld [vmem:[%s3 + $0x5c0] sm:$0xff]
    %v1785 = vld [vmem:[%s3 + $0x5c8] sm:$0xf]
    %v1786 = vld [vmem:[%s3 + $0x5cc] sm:$0xff]
    %v1787 = vld [vmem:[%s3 + $0x5d4] sm:$0xff]
    %v1788 = vld [vmem:[%s3 + $0x5dc] sm:$0xff]
    %v1789 = vld [vmem:[%s3 + $0x5e4] sm:$0xf]
    %v1790 = vld [vmem:[%s3 + $0x5e8] sm:$0xff]
    %v1791 = vld [vmem:[%s3 + $0x5f0] sm:$0xff]
    %v1792 = vld [vmem:[%s3 + $0x5f8] sm:$0xff]
    %v1793 = vld [vmem:[%s3 + $0x600] sm:$0xf]
    %v1794 = vld [vmem:[%s3 + $0x604] sm:$0xff]
    %v1795 = vld [vmem:[%s3 + $0x60c] sm:$0xff]
    %v1796 = vld [vmem:[%s3 + $0x614] sm:$0xff]
    %v1797 = vld [vmem:[%s3 + $0x61c] sm:$0xf]
    %v1798 = vld [vmem:[%s3 + $0x620] sm:$0xff]
    %v1799 = vld [vmem:[%s3 + $0x628] sm:$0xff]
    %v1800 = vld [vmem:[%s3 + $0x630] sm:$0xff]
    %v1801 = vld [vmem:[%s3 + $0x638] sm:$0xf]
    %v1802 = vld [vmem:[%s3 + $0x63c] sm:$0xff]
    %v1803 = vld [vmem:[%s3 + $0x644] sm:$0xff]
    %v1804 = vld [vmem:[%s3 + $0x64c] sm:$0xff]
    %v1805 = vld [vmem:[%s3 + $0x654] sm:$0xf]
    %v1806 = vld [vmem:[%s3 + $0x658] sm:$0xff]
    %v1807 = vld [vmem:[%s3 + $0x660] sm:$0xff]
    %v1808 = vld [vmem:[%s3 + $0x668] sm:$0xff]
    %v1809 = vld [vmem:[%s3 + $0x670] sm:$0xf]
    %v1810 = vld [vmem:[%s3 + $0x674] sm:$0xff]
    %v1811 = vld [vmem:[%s3 + $0x67c] sm:$0xff]
    %v1812 = vld [vmem:[%s3 + $0x684] sm:$0xff]
    %v1813 = vld [vmem:[%s3 + $0x68c] sm:$0xf]
    %v1814 = vld [vmem:[%s3 + $0x690] sm:$0xff]
    %v1815 = vld [vmem:[%s3 + $0x698] sm:$0xff]
    %v1816 = vld [vmem:[%s3 + $0x6a0] sm:$0xff]
    %v1817 = vld [vmem:[%s3 + $0x6a8] sm:$0xf]
    %v1818 = vld [vmem:[%s3 + $0x6ac] sm:$0xff]
    %v1819 = vld [vmem:[%s3 + $0x6b4] sm:$0xff]
    %v1820 = vld [vmem:[%s3 + $0x6bc] sm:$0xff]
    %v1821 = vld [vmem:[%s3 + $0x6c4] sm:$0xf]
    %v1822 = vld [vmem:[%s3 + $0x6c8] sm:$0xff]
    %v1823 = vld [vmem:[%s3 + $0x6d0] sm:$0xff]
    %v1824 = vld [vmem:[%s3 + $0x6d8] sm:$0xff]
    %v1825 = vld [vmem:[%s3 + $0x6e0] sm:$0xf]
    %v1826 = vld [vmem:[%s3 + $0x6e4] sm:$0xff]
    %v1827 = vld [vmem:[%s3 + $0x6ec] sm:$0xff]
    %v1828 = vld [vmem:[%s3 + $0x6f4] sm:$0xff]
    %v1829 = vld [vmem:[%s3 + $0x6fc] sm:$0xf]
    %v1830 = vld [vmem:[%s4] sm:$0x7f]
    %v1832 = vlaneseq
    %v1833 = vshrl.u32 %v1832, 7
    %v1834 = vsub.s32 0, %v1833
    %v1835 = vrot.slane %v1830, %v1834
    %v1836 = vlaneseq
    %v1837 = vshrl.u32 %v1836, 7
    %v1838 = vsub.s32 1, %v1837
    %v1839 = vrot.slane %v1830, %v1838
    %v1840 = vlaneseq
    %v1841 = vshrl.u32 %v1840, 7
    %v1842 = vsub.s32 2, %v1841
    %v1843 = vrot.slane %v1830, %v1842
    %v1844 = vlaneseq
    %v1845 = vshrl.u32 %v1844, 7
    %v1846 = vsub.s32 3, %v1845
    %v1847 = vrot.slane %v1830, %v1846
    %v1848 = vlaneseq
    %v1849 = vshrl.u32 %v1848, 7
    %v1850 = vsub.s32 4, %v1849
    %v1851 = vrot.slane %v1830, %v1850
    %v1852 = vlaneseq
    %v1853 = vshrl.u32 %v1852, 7
    %v1854 = vsub.s32 5, %v1853
    %v1855 = vrot.slane %v1830, %v1854
    %v1856 = vlaneseq
    %v1857 = vshrl.u32 %v1856, 7
    %v1858 = vsub.s32 6, %v1857
    %v1859 = vrot.slane %v1830, %v1858
    %v2123 = vunpack.c.l.b16 %v1574
    %v2124 = vunpack.c.h.b16 %v1574
    %v2125 = vunpack.c.l.b16 %v1575
    %v2126 = vunpack.c.h.b16 %v1575
    %v2127 = vunpack.c.l.b16 %v1576
    %v2128 = vunpack.c.h.b16 %v1576
    %v2129 = vunpack.c.l.b16 %v1577
    %v2130 = vunpack.c.l.b16 %v1578
    %v2131 = vunpack.c.h.b16 %v1578
    %v2132 = vunpack.c.l.b16 %v1579
    %v2133 = vunpack.c.h.b16 %v1579
    %v2134 = vunpack.c.l.b16 %v1580
    %v2135 = vunpack.c.h.b16 %v1580
    %v2136 = vunpack.c.l.b16 %v1581
    %v2137 = vunpack.c.l.b16 %v1582
    %v2138 = vunpack.c.h.b16 %v1582
    %v2139 = vunpack.c.l.b16 %v1583
    %v2140 = vunpack.c.h.b16 %v1583
    %v2141 = vunpack.c.l.b16 %v1584
    %v2142 = vunpack.c.h.b16 %v1584
    %v2143 = vunpack.c.l.b16 %v1585
    %v2144 = vunpack.c.l.b16 %v1586
    %v2145 = vunpack.c.h.b16 %v1586
    %v2146 = vunpack.c.l.b16 %v1587
    %v2147 = vunpack.c.h.b16 %v1587
    %v2148 = vunpack.c.l.b16 %v1588
    %v2149 = vunpack.c.h.b16 %v1588
    %v2150 = vunpack.c.l.b16 %v1589
    %v2151 = vunpack.c.l.b16 %v1590
    %v2152 = vunpack.c.h.b16 %v1590
    %v2153 = vunpack.c.l.b16 %v1591
    %v2154 = vunpack.c.h.b16 %v1591
    %v2155 = vunpack.c.l.b16 %v1592
    %v2156 = vunpack.c.h.b16 %v1592
    %v2157 = vunpack.c.l.b16 %v1593
    %v2158 = vunpack.c.l.b16 %v1594
    %v2159 = vunpack.c.h.b16 %v1594
    %v2160 = vunpack.c.l.b16 %v1595
    %v2161 = vunpack.c.h.b16 %v1595
    %v2162 = vunpack.c.l.b16 %v1596
    %v2163 = vunpack.c.h.b16 %v1596
    %v2164 = vunpack.c.l.b16 %v1597
    %v2165 = vunpack.c.l.b16 %v1598
    %v2166 = vunpack.c.h.b16 %v1598
    %v2167 = vunpack.c.l.b16 %v1599
    %v2168 = vunpack.c.h.b16 %v1599
    %v2169 = vunpack.c.l.b16 %v1600
    %v2170 = vunpack.c.h.b16 %v1600
    %v2171 = vunpack.c.l.b16 %v1601
    %v2172 = vunpack.c.l.b16 %v1602
    %v2173 = vunpack.c.h.b16 %v1602
    %v2174 = vunpack.c.l.b16 %v1603
    %v2175 = vunpack.c.h.b16 %v1603
    %v2176 = vunpack.c.l.b16 %v1604
    %v2177 = vunpack.c.h.b16 %v1604
    %v2178 = vunpack.c.l.b16 %v1605
    %v2179 = vunpack.c.l.b16 %v1606
    %v2180 = vunpack.c.h.b16 %v1606
    %v2181 = vunpack.c.l.b16 %v1607
    %v2182 = vunpack.c.h.b16 %v1607
    %v2183 = vunpack.c.l.b16 %v1608
    %v2184 = vunpack.c.h.b16 %v1608
    %v2185 = vunpack.c.l.b16 %v1609
    %v2186 = vunpack.c.l.b16 %v1610
    %v2187 = vunpack.c.h.b16 %v1610
    %v2188 = vunpack.c.l.b16 %v1611
    %v2189 = vunpack.c.h.b16 %v1611
    %v2190 = vunpack.c.l.b16 %v1612
    %v2191 = vunpack.c.h.b16 %v1612
    %v2192 = vunpack.c.l.b16 %v1613
    %v2193 = vunpack.c.l.b16 %v1614
    %v2194 = vunpack.c.h.b16 %v1614
    %v2195 = vunpack.c.l.b16 %v1615
    %v2196 = vunpack.c.h.b16 %v1615
    %v2197 = vunpack.c.l.b16 %v1616
    %v2198 = vunpack.c.h.b16 %v1616
    %v2199 = vunpack.c.l.b16 %v1617
    %v2200 = vunpack.c.l.b16 %v1618
    %v2201 = vunpack.c.h.b16 %v1618
    %v2202 = vunpack.c.l.b16 %v1619
    %v2203 = vunpack.c.h.b16 %v1619
    %v2204 = vunpack.c.l.b16 %v1620
    %v2205 = vunpack.c.h.b16 %v1620
    %v2206 = vunpack.c.l.b16 %v1621
    %v2207 = vunpack.c.l.b16 %v1622
    %v2208 = vunpack.c.h.b16 %v1622
    %v2209 = vunpack.c.l.b16 %v1623
    %v2210 = vunpack.c.h.b16 %v1623
    %v2211 = vunpack.c.l.b16 %v1624
    %v2212 = vunpack.c.h.b16 %v1624
    %v2213 = vunpack.c.l.b16 %v1625
    %v2214 = vunpack.c.l.b16 %v1626
    %v2215 = vunpack.c.h.b16 %v1626
    %v2216 = vunpack.c.l.b16 %v1627
    %v2217 = vunpack.c.h.b16 %v1627
    %v2218 = vunpack.c.l.b16 %v1628
    %v2219 = vunpack.c.h.b16 %v1628
    %v2220 = vunpack.c.l.b16 %v1629
    %v2221 = vunpack.c.l.b16 %v1630
    %v2222 = vunpack.c.h.b16 %v1630
    %v2223 = vunpack.c.l.b16 %v1631
    %v2224 = vunpack.c.h.b16 %v1631
    %v2225 = vunpack.c.l.b16 %v1632
    %v2226 = vunpack.c.h.b16 %v1632
    %v2227 = vunpack.c.l.b16 %v1633
    %v2228 = vunpack.c.l.b16 %v1634
    %v2229 = vunpack.c.h.b16 %v1634
    %v2230 = vunpack.c.l.b16 %v1635
    %v2231 = vunpack.c.h.b16 %v1635
    %v2232 = vunpack.c.l.b16 %v1636
    %v2233 = vunpack.c.h.b16 %v1636
    %v2234 = vunpack.c.l.b16 %v1637
    %v2235 = vunpack.c.l.b16 %v1638
    %v2236 = vunpack.c.h.b16 %v1638
    %v2237 = vunpack.c.l.b16 %v1639
    %v2238 = vunpack.c.h.b16 %v1639
    %v2239 = vunpack.c.l.b16 %v1640
    %v2240 = vunpack.c.h.b16 %v1640
    %v2241 = vunpack.c.l.b16 %v1641
    %v2242 = vunpack.c.l.b16 %v1642
    %v2243 = vunpack.c.h.b16 %v1642
    %v2244 = vunpack.c.l.b16 %v1643
    %v2245 = vunpack.c.h.b16 %v1643
    %v2246 = vunpack.c.l.b16 %v1644
    %v2247 = vunpack.c.h.b16 %v1644
    %v2248 = vunpack.c.l.b16 %v1645
    %v2249 = vunpack.c.l.b16 %v1646
    %v2250 = vunpack.c.h.b16 %v1646
    %v2251 = vunpack.c.l.b16 %v1647
    %v2252 = vunpack.c.h.b16 %v1647
    %v2253 = vunpack.c.l.b16 %v1648
    %v2254 = vunpack.c.h.b16 %v1648
    %v2255 = vunpack.c.l.b16 %v1649
    %v2256 = vunpack.c.l.b16 %v1650
    %v2257 = vunpack.c.h.b16 %v1650
    %v2258 = vunpack.c.l.b16 %v1651
    %v2259 = vunpack.c.h.b16 %v1651
    %v2260 = vunpack.c.l.b16 %v1652
    %v2261 = vunpack.c.h.b16 %v1652
    %v2262 = vunpack.c.l.b16 %v1653
    %v2263 = vunpack.c.l.b16 %v1654
    %v2264 = vunpack.c.h.b16 %v1654
    %v2265 = vunpack.c.l.b16 %v1655
    %v2266 = vunpack.c.h.b16 %v1655
    %v2267 = vunpack.c.l.b16 %v1656
    %v2268 = vunpack.c.h.b16 %v1656
    %v2269 = vunpack.c.l.b16 %v1657
    %v2270 = vunpack.c.l.b16 %v1658
    %v2271 = vunpack.c.h.b16 %v1658
    %v2272 = vunpack.c.l.b16 %v1659
    %v2273 = vunpack.c.h.b16 %v1659
    %v2274 = vunpack.c.l.b16 %v1660
    %v2275 = vunpack.c.h.b16 %v1660
    %v2276 = vunpack.c.l.b16 %v1661
    %v2277 = vunpack.c.l.b16 %v1662
    %v2278 = vunpack.c.h.b16 %v1662
    %v2279 = vunpack.c.l.b16 %v1663
    %v2280 = vunpack.c.h.b16 %v1663
    %v2281 = vunpack.c.l.b16 %v1664
    %v2282 = vunpack.c.h.b16 %v1664
    %v2283 = vunpack.c.l.b16 %v1665
    %v2284 = vunpack.c.l.b16 %v1666
    %v2285 = vunpack.c.h.b16 %v1666
    %v2286 = vunpack.c.l.b16 %v1667
    %v2287 = vunpack.c.h.b16 %v1667
    %v2288 = vunpack.c.l.b16 %v1668
    %v2289 = vunpack.c.h.b16 %v1668
    %v2290 = vunpack.c.l.b16 %v1669
    %v2291 = vunpack.c.l.b16 %v1670
    %v2292 = vunpack.c.h.b16 %v1670
    %v2293 = vunpack.c.l.b16 %v1671
    %v2294 = vunpack.c.h.b16 %v1671
    %v2295 = vunpack.c.l.b16 %v1672
    %v2296 = vunpack.c.h.b16 %v1672
    %v2297 = vunpack.c.l.b16 %v1673
    %v2298 = vunpack.c.l.b16 %v1674
    %v2299 = vunpack.c.h.b16 %v1674
    %v2300 = vunpack.c.l.b16 %v1675
    %v2301 = vunpack.c.h.b16 %v1675
    %v2302 = vunpack.c.l.b16 %v1676
    %v2303 = vunpack.c.h.b16 %v1676
    %v2304 = vunpack.c.l.b16 %v1677
    %v2305 = vunpack.c.l.b16 %v1678
    %v2306 = vunpack.c.h.b16 %v1678
    %v2307 = vunpack.c.l.b16 %v1679
    %v2308 = vunpack.c.h.b16 %v1679
    %v2309 = vunpack.c.l.b16 %v1680
    %v2310 = vunpack.c.h.b16 %v1680
    %v2311 = vunpack.c.l.b16 %v1681
    %v2312 = vunpack.c.l.b16 %v1682
    %v2313 = vunpack.c.h.b16 %v1682
    %v2314 = vunpack.c.l.b16 %v1683
    %v2315 = vunpack.c.h.b16 %v1683
    %v2316 = vunpack.c.l.b16 %v1684
    %v2317 = vunpack.c.h.b16 %v1684
    %v2318 = vunpack.c.l.b16 %v1685
    %v2319 = vunpack.c.l.b16 %v1686
    %v2320 = vunpack.c.h.b16 %v1686
    %v2321 = vunpack.c.l.b16 %v1687
    %v2322 = vunpack.c.h.b16 %v1687
    %v2323 = vunpack.c.l.b16 %v1688
    %v2324 = vunpack.c.h.b16 %v1688
    %v2325 = vunpack.c.l.b16 %v1689
    %v2326 = vunpack.c.l.b16 %v1690
    %v2327 = vunpack.c.h.b16 %v1690
    %v2328 = vunpack.c.l.b16 %v1691
    %v2329 = vunpack.c.h.b16 %v1691
    %v2330 = vunpack.c.l.b16 %v1692
    %v2331 = vunpack.c.h.b16 %v1692
    %v2332 = vunpack.c.l.b16 %v1693
    %v2333 = vunpack.c.l.b16 %v1694
    %v2334 = vunpack.c.h.b16 %v1694
    %v2335 = vunpack.c.l.b16 %v1695
    %v2336 = vunpack.c.h.b16 %v1695
    %v2337 = vunpack.c.l.b16 %v1696
    %v2338 = vunpack.c.h.b16 %v1696
    %v2339 = vunpack.c.l.b16 %v1697
    %v2340 = vunpack.c.l.b16 %v1698
    %v2341 = vunpack.c.h.b16 %v1698
    %v2342 = vunpack.c.l.b16 %v1699
    %v2343 = vunpack.c.h.b16 %v1699
    %v2344 = vunpack.c.l.b16 %v1700
    %v2345 = vunpack.c.h.b16 %v1700
    %v2346 = vunpack.c.l.b16 %v1701
    %v2347 = vunpack.c.l.b16 %v1702
    %v2348 = vunpack.c.h.b16 %v1702
    %v2349 = vunpack.c.l.b16 %v1703
    %v2350 = vunpack.c.h.b16 %v1703
    %v2351 = vunpack.c.l.b16 %v1704
    %v2352 = vunpack.c.h.b16 %v1704
    %v2353 = vunpack.c.l.b16 %v1705
    %v2354 = vunpack.c.l.b16 %v1706
    %v2355 = vunpack.c.h.b16 %v1706
    %v2356 = vunpack.c.l.b16 %v1707
    %v2357 = vunpack.c.h.b16 %v1707
    %v2358 = vunpack.c.l.b16 %v1708
    %v2359 = vunpack.c.h.b16 %v1708
    %v2360 = vunpack.c.l.b16 %v1709
    %v2361 = vunpack.c.l.b16 %v1710
    %v2362 = vunpack.c.h.b16 %v1710
    %v2363 = vunpack.c.l.b16 %v1711
    %v2364 = vunpack.c.h.b16 %v1711
    %v2365 = vunpack.c.l.b16 %v1712
    %v2366 = vunpack.c.h.b16 %v1712
    %v2367 = vunpack.c.l.b16 %v1713
    %v2368 = vunpack.c.l.b16 %v1714
    %v2369 = vunpack.c.h.b16 %v1714
    %v2370 = vunpack.c.l.b16 %v1715
    %v2371 = vunpack.c.h.b16 %v1715
    %v2372 = vunpack.c.l.b16 %v1716
    %v2373 = vunpack.c.h.b16 %v1716
    %v2374 = vunpack.c.l.b16 %v1717
    %v2375 = vunpack.c.l.b16 %v1718
    %v2376 = vunpack.c.h.b16 %v1718
    %v2377 = vunpack.c.l.b16 %v1719
    %v2378 = vunpack.c.h.b16 %v1719
    %v2379 = vunpack.c.l.b16 %v1720
    %v2380 = vunpack.c.h.b16 %v1720
    %v2381 = vunpack.c.l.b16 %v1721
    %v2382 = vunpack.c.l.b16 %v1722
    %v2383 = vunpack.c.h.b16 %v1722
    %v2384 = vunpack.c.l.b16 %v1723
    %v2385 = vunpack.c.h.b16 %v1723
    %v2386 = vunpack.c.l.b16 %v1724
    %v2387 = vunpack.c.h.b16 %v1724
    %v2388 = vunpack.c.l.b16 %v1725
    %v2389 = vunpack.c.l.b16 %v1726
    %v2390 = vunpack.c.h.b16 %v1726
    %v2391 = vunpack.c.l.b16 %v1727
    %v2392 = vunpack.c.h.b16 %v1727
    %v2393 = vunpack.c.l.b16 %v1728
    %v2394 = vunpack.c.h.b16 %v1728
    %v2395 = vunpack.c.l.b16 %v1729
    %v2396 = vunpack.c.l.b16 %v1730
    %v2397 = vunpack.c.h.b16 %v1730
    %v2398 = vunpack.c.l.b16 %v1731
    %v2399 = vunpack.c.h.b16 %v1731
    %v2400 = vunpack.c.l.b16 %v1732
    %v2401 = vunpack.c.h.b16 %v1732
    %v2402 = vunpack.c.l.b16 %v1733
    %v2403 = vunpack.c.l.b16 %v1734
    %v2404 = vunpack.c.h.b16 %v1734
    %v2405 = vunpack.c.l.b16 %v1735
    %v2406 = vunpack.c.h.b16 %v1735
    %v2407 = vunpack.c.l.b16 %v1736
    %v2408 = vunpack.c.h.b16 %v1736
    %v2409 = vunpack.c.l.b16 %v1737
    %v2410 = vunpack.c.l.b16 %v1738
    %v2411 = vunpack.c.h.b16 %v1738
    %v2412 = vunpack.c.l.b16 %v1739
    %v2413 = vunpack.c.h.b16 %v1739
    %v2414 = vunpack.c.l.b16 %v1740
    %v2415 = vunpack.c.h.b16 %v1740
    %v2416 = vunpack.c.l.b16 %v1741
    %v2417 = vunpack.c.l.b16 %v1742
    %v2418 = vunpack.c.h.b16 %v1742
    %v2419 = vunpack.c.l.b16 %v1743
    %v2420 = vunpack.c.h.b16 %v1743
    %v2421 = vunpack.c.l.b16 %v1744
    %v2422 = vunpack.c.h.b16 %v1744
    %v2423 = vunpack.c.l.b16 %v1745
    %v2424 = vunpack.c.l.b16 %v1746
    %v2425 = vunpack.c.h.b16 %v1746
    %v2426 = vunpack.c.l.b16 %v1747
    %v2427 = vunpack.c.h.b16 %v1747
    %v2428 = vunpack.c.l.b16 %v1748
    %v2429 = vunpack.c.h.b16 %v1748
    %v2430 = vunpack.c.l.b16 %v1749
    %v2431 = vunpack.c.l.b16 %v1750
    %v2432 = vunpack.c.h.b16 %v1750
    %v2433 = vunpack.c.l.b16 %v1751
    %v2434 = vunpack.c.h.b16 %v1751
    %v2435 = vunpack.c.l.b16 %v1752
    %v2436 = vunpack.c.h.b16 %v1752
    %v2437 = vunpack.c.l.b16 %v1753
    %v2438 = vunpack.c.l.b16 %v1754
    %v2439 = vunpack.c.h.b16 %v1754
    %v2440 = vunpack.c.l.b16 %v1755
    %v2441 = vunpack.c.h.b16 %v1755
    %v2442 = vunpack.c.l.b16 %v1756
    %v2443 = vunpack.c.h.b16 %v1756
    %v2444 = vunpack.c.l.b16 %v1757
    %v2445 = vunpack.c.l.b16 %v1758
    %v2446 = vunpack.c.h.b16 %v1758
    %v2447 = vunpack.c.l.b16 %v1759
    %v2448 = vunpack.c.h.b16 %v1759
    %v2449 = vunpack.c.l.b16 %v1760
    %v2450 = vunpack.c.h.b16 %v1760
    %v2451 = vunpack.c.l.b16 %v1761
    %v2452 = vunpack.c.l.b16 %v1762
    %v2453 = vunpack.c.h.b16 %v1762
    %v2454 = vunpack.c.l.b16 %v1763
    %v2455 = vunpack.c.h.b16 %v1763
    %v2456 = vunpack.c.l.b16 %v1764
    %v2457 = vunpack.c.h.b16 %v1764
    %v2458 = vunpack.c.l.b16 %v1765
    %v2459 = vunpack.c.l.b16 %v1766
    %v2460 = vunpack.c.h.b16 %v1766
    %v2461 = vunpack.c.l.b16 %v1767
    %v2462 = vunpack.c.h.b16 %v1767
    %v2463 = vunpack.c.l.b16 %v1768
    %v2464 = vunpack.c.h.b16 %v1768
    %v2465 = vunpack.c.l.b16 %v1769
    %v2466 = vunpack.c.l.b16 %v1770
    %v2467 = vunpack.c.h.b16 %v1770
    %v2468 = vunpack.c.l.b16 %v1771
    %v2469 = vunpack.c.h.b16 %v1771
    %v2470 = vunpack.c.l.b16 %v1772
    %v2471 = vunpack.c.h.b16 %v1772
    %v2472 = vunpack.c.l.b16 %v1773
    %v2473 = vunpack.c.l.b16 %v1774
    %v2474 = vunpack.c.h.b16 %v1774
    %v2475 = vunpack.c.l.b16 %v1775
    %v2476 = vunpack.c.h.b16 %v1775
    %v2477 = vunpack.c.l.b16 %v1776
    %v2478 = vunpack.c.h.b16 %v1776
    %v2479 = vunpack.c.l.b16 %v1777
    %v2480 = vunpack.c.l.b16 %v1778
    %v2481 = vunpack.c.h.b16 %v1778
    %v2482 = vunpack.c.l.b16 %v1779
    %v2483 = vunpack.c.h.b16 %v1779
    %v2484 = vunpack.c.l.b16 %v1780
    %v2485 = vunpack.c.h.b16 %v1780
    %v2486 = vunpack.c.l.b16 %v1781
    %v2487 = vunpack.c.l.b16 %v1782
    %v2488 = vunpack.c.h.b16 %v1782
    %v2489 = vunpack.c.l.b16 %v1783
    %v2490 = vunpack.c.h.b16 %v1783
    %v2491 = vunpack.c.l.b16 %v1784
    %v2492 = vunpack.c.h.b16 %v1784
    %v2493 = vunpack.c.l.b16 %v1785
    %v2494 = vunpack.c.l.b16 %v1786
    %v2495 = vunpack.c.h.b16 %v1786
    %v2496 = vunpack.c.l.b16 %v1787
    %v2497 = vunpack.c.h.b16 %v1787
    %v2498 = vunpack.c.l.b16 %v1788
    %v2499 = vunpack.c.h.b16 %v1788
    %v2500 = vunpack.c.l.b16 %v1789
    %v2501 = vunpack.c.l.b16 %v1790
    %v2502 = vunpack.c.h.b16 %v1790
    %v2503 = vunpack.c.l.b16 %v1791
    %v2504 = vunpack.c.h.b16 %v1791
    %v2505 = vunpack.c.l.b16 %v1792
    %v2506 = vunpack.c.h.b16 %v1792
    %v2507 = vunpack.c.l.b16 %v1793
    %v2508 = vunpack.c.l.b16 %v1794
    %v2509 = vunpack.c.h.b16 %v1794
    %v2510 = vunpack.c.l.b16 %v1795
    %v2511 = vunpack.c.h.b16 %v1795
    %v2512 = vunpack.c.l.b16 %v1796
    %v2513 = vunpack.c.h.b16 %v1796
    %v2514 = vunpack.c.l.b16 %v1797
    %v2515 = vunpack.c.l.b16 %v1798
    %v2516 = vunpack.c.h.b16 %v1798
    %v2517 = vunpack.c.l.b16 %v1799
    %v2518 = vunpack.c.h.b16 %v1799
    %v2519 = vunpack.c.l.b16 %v1800
    %v2520 = vunpack.c.h.b16 %v1800
    %v2521 = vunpack.c.l.b16 %v1801
    %v2522 = vunpack.c.l.b16 %v1802
    %v2523 = vunpack.c.h.b16 %v1802
    %v2524 = vunpack.c.l.b16 %v1803
    %v2525 = vunpack.c.h.b16 %v1803
    %v2526 = vunpack.c.l.b16 %v1804
    %v2527 = vunpack.c.h.b16 %v1804
    %v2528 = vunpack.c.l.b16 %v1805
    %v2529 = vunpack.c.l.b16 %v1806
    %v2530 = vunpack.c.h.b16 %v1806
    %v2531 = vunpack.c.l.b16 %v1807
    %v2532 = vunpack.c.h.b16 %v1807
    %v2533 = vunpack.c.l.b16 %v1808
    %v2534 = vunpack.c.h.b16 %v1808
    %v2535 = vunpack.c.l.b16 %v1809
    %v2536 = vunpack.c.l.b16 %v1810
    %v2537 = vunpack.c.h.b16 %v1810
    %v2538 = vunpack.c.l.b16 %v1811
    %v2539 = vunpack.c.h.b16 %v1811
    %v2540 = vunpack.c.l.b16 %v1812
    %v2541 = vunpack.c.h.b16 %v1812
    %v2542 = vunpack.c.l.b16 %v1813
    %v2543 = vunpack.c.l.b16 %v1814
    %v2544 = vunpack.c.h.b16 %v1814
    %v2545 = vunpack.c.l.b16 %v1815
    %v2546 = vunpack.c.h.b16 %v1815
    %v2547 = vunpack.c.l.b16 %v1816
    %v2548 = vunpack.c.h.b16 %v1816
    %v2549 = vunpack.c.l.b16 %v1817
    %v2550 = vunpack.c.l.b16 %v1818
    %v2551 = vunpack.c.h.b16 %v1818
    %v2552 = vunpack.c.l.b16 %v1819
    %v2553 = vunpack.c.h.b16 %v1819
    %v2554 = vunpack.c.l.b16 %v1820
    %v2555 = vunpack.c.h.b16 %v1820
    %v2556 = vunpack.c.l.b16 %v1821
    %v2557 = vunpack.c.l.b16 %v1822
    %v2558 = vunpack.c.h.b16 %v1822
    %v2559 = vunpack.c.l.b16 %v1823
    %v2560 = vunpack.c.h.b16 %v1823
    %v2561 = vunpack.c.l.b16 %v1824
    %v2562 = vunpack.c.h.b16 %v1824
    %v2563 = vunpack.c.l.b16 %v1825
    %v2564 = vunpack.c.l.b16 %v1826
    %v2565 = vunpack.c.h.b16 %v1826
    %v2566 = vunpack.c.l.b16 %v1827
    %v2567 = vunpack.c.h.b16 %v1827
    %v2568 = vunpack.c.l.b16 %v1828
    %v2569 = vunpack.c.h.b16 %v1828
    %v2570 = vunpack.c.l.b16 %v1829
    %v2571 = vpack.c.b16 %v2130, %v2123
    %v2572 = vpack.c.b16 %v2131, %v2124
    %v2573 = vpack.c.b16 %v2132, %v2125
    %v2574 = vpack.c.b16 %v2133, %v2126
    %v2575 = vpack.c.b16 %v2134, %v2127
    %v2576 = vpack.c.b16 %v2135, %v2128
    %v2577 = vpack.c.b16 %v2136, %v2129
    %v2578 = vpack.c.b16 %v2144, %v2137
    %v2579 = vpack.c.b16 %v2145, %v2138
    %v2580 = vpack.c.b16 %v2146, %v2139
    %v2581 = vpack.c.b16 %v2147, %v2140
    %v2582 = vpack.c.b16 %v2148, %v2141
    %v2583 = vpack.c.b16 %v2149, %v2142
    %v2584 = vpack.c.b16 %v2150, %v2143
    %v2585 = vpack.c.b16 %v2158, %v2151
    %v2586 = vpack.c.b16 %v2159, %v2152
    %v2587 = vpack.c.b16 %v2160, %v2153
    %v2588 = vpack.c.b16 %v2161, %v2154
    %v2589 = vpack.c.b16 %v2162, %v2155
    %v2590 = vpack.c.b16 %v2163, %v2156
    %v2591 = vpack.c.b16 %v2164, %v2157
    %v2592 = vpack.c.b16 %v2172, %v2165
    %v2593 = vpack.c.b16 %v2173, %v2166
    %v2594 = vpack.c.b16 %v2174, %v2167
    %v2595 = vpack.c.b16 %v2175, %v2168
    %v2596 = vpack.c.b16 %v2176, %v2169
    %v2597 = vpack.c.b16 %v2177, %v2170
    %v2598 = vpack.c.b16 %v2178, %v2171
    %v2599 = vpack.c.b16 %v2186, %v2179
    %v2600 = vpack.c.b16 %v2187, %v2180
    %v2601 = vpack.c.b16 %v2188, %v2181
    %v2602 = vpack.c.b16 %v2189, %v2182
    %v2603 = vpack.c.b16 %v2190, %v2183
    %v2604 = vpack.c.b16 %v2191, %v2184
    %v2605 = vpack.c.b16 %v2192, %v2185
    %v2606 = vpack.c.b16 %v2200, %v2193
    %v2607 = vpack.c.b16 %v2201, %v2194
    %v2608 = vpack.c.b16 %v2202, %v2195
    %v2609 = vpack.c.b16 %v2203, %v2196
    %v2610 = vpack.c.b16 %v2204, %v2197
    %v2611 = vpack.c.b16 %v2205, %v2198
    %v2612 = vpack.c.b16 %v2206, %v2199
    %v2613 = vpack.c.b16 %v2214, %v2207
    %v2614 = vpack.c.b16 %v2215, %v2208
    %v2615 = vpack.c.b16 %v2216, %v2209
    %v2616 = vpack.c.b16 %v2217, %v2210
    %v2617 = vpack.c.b16 %v2218, %v2211
    %v2618 = vpack.c.b16 %v2219, %v2212
    %v2619 = vpack.c.b16 %v2220, %v2213
    %v2620 = vpack.c.b16 %v2228, %v2221
    %v2621 = vpack.c.b16 %v2229, %v2222
    %v2622 = vpack.c.b16 %v2230, %v2223
    %v2623 = vpack.c.b16 %v2231, %v2224
    %v2624 = vpack.c.b16 %v2232, %v2225
    %v2625 = vpack.c.b16 %v2233, %v2226
    %v2626 = vpack.c.b16 %v2234, %v2227
    %v2627 = vpack.c.b16 %v2242, %v2235
    %v2628 = vpack.c.b16 %v2243, %v2236
    %v2629 = vpack.c.b16 %v2244, %v2237
    %v2630 = vpack.c.b16 %v2245, %v2238
    %v2631 = vpack.c.b16 %v2246, %v2239
    %v2632 = vpack.c.b16 %v2247, %v2240
    %v2633 = vpack.c.b16 %v2248, %v2241
    %v2634 = vpack.c.b16 %v2256, %v2249
    %v2635 = vpack.c.b16 %v2257, %v2250
    %v2636 = vpack.c.b16 %v2258, %v2251
    %v2637 = vpack.c.b16 %v2259, %v2252
    %v2638 = vpack.c.b16 %v2260, %v2253
    %v2639 = vpack.c.b16 %v2261, %v2254
    %v2640 = vpack.c.b16 %v2262, %v2255
    %v2641 = vpack.c.b16 %v2270, %v2263
    %v2642 = vpack.c.b16 %v2271, %v2264
    %v2643 = vpack.c.b16 %v2272, %v2265
    %v2644 = vpack.c.b16 %v2273, %v2266
    %v2645 = vpack.c.b16 %v2274, %v2267
    %v2646 = vpack.c.b16 %v2275, %v2268
    %v2647 = vpack.c.b16 %v2276, %v2269
    %v2648 = vpack.c.b16 %v2284, %v2277
    %v2649 = vpack.c.b16 %v2285, %v2278
    %v2650 = vpack.c.b16 %v2286, %v2279
    %v2651 = vpack.c.b16 %v2287, %v2280
    %v2652 = vpack.c.b16 %v2288, %v2281
    %v2653 = vpack.c.b16 %v2289, %v2282
    %v2654 = vpack.c.b16 %v2290, %v2283
    %v2655 = vpack.c.b16 %v2298, %v2291
    %v2656 = vpack.c.b16 %v2299, %v2292
    %v2657 = vpack.c.b16 %v2300, %v2293
    %v2658 = vpack.c.b16 %v2301, %v2294
    %v2659 = vpack.c.b16 %v2302, %v2295
    %v2660 = vpack.c.b16 %v2303, %v2296
    %v2661 = vpack.c.b16 %v2304, %v2297
    %v2662 = vpack.c.b16 %v2312, %v2305
    %v2663 = vpack.c.b16 %v2313, %v2306
    %v2664 = vpack.c.b16 %v2314, %v2307
    %v2665 = vpack.c.b16 %v2315, %v2308
    %v2666 = vpack.c.b16 %v2316, %v2309
    %v2667 = vpack.c.b16 %v2317, %v2310
    %v2668 = vpack.c.b16 %v2318, %v2311
    %v2669 = vpack.c.b16 %v2326, %v2319
    %v2670 = vpack.c.b16 %v2327, %v2320
    %v2671 = vpack.c.b16 %v2328, %v2321
    %v2672 = vpack.c.b16 %v2329, %v2322
    %v2673 = vpack.c.b16 %v2330, %v2323
    %v2674 = vpack.c.b16 %v2331, %v2324
    %v2675 = vpack.c.b16 %v2332, %v2325
    %v2676 = vpack.c.b16 %v2340, %v2333
    %v2677 = vpack.c.b16 %v2341, %v2334
    %v2678 = vpack.c.b16 %v2342, %v2335
    %v2679 = vpack.c.b16 %v2343, %v2336
    %v2680 = vpack.c.b16 %v2344, %v2337
    %v2681 = vpack.c.b16 %v2345, %v2338
    %v2682 = vpack.c.b16 %v2346, %v2339
    %v2683 = vpack.c.b16 %v2354, %v2347
    %v2684 = vpack.c.b16 %v2355, %v2348
    %v2685 = vpack.c.b16 %v2356, %v2349
    %v2686 = vpack.c.b16 %v2357, %v2350
    %v2687 = vpack.c.b16 %v2358, %v2351
    %v2688 = vpack.c.b16 %v2359, %v2352
    %v2689 = vpack.c.b16 %v2360, %v2353
    %v2690 = vpack.c.b16 %v2368, %v2361
    %v2691 = vpack.c.b16 %v2369, %v2362
    %v2692 = vpack.c.b16 %v2370, %v2363
    %v2693 = vpack.c.b16 %v2371, %v2364
    %v2694 = vpack.c.b16 %v2372, %v2365
    %v2695 = vpack.c.b16 %v2373, %v2366
    %v2696 = vpack.c.b16 %v2374, %v2367
    %v2697 = vpack.c.b16 %v2382, %v2375
    %v2698 = vpack.c.b16 %v2383, %v2376
    %v2699 = vpack.c.b16 %v2384, %v2377
    %v2700 = vpack.c.b16 %v2385, %v2378
    %v2701 = vpack.c.b16 %v2386, %v2379
    %v2702 = vpack.c.b16 %v2387, %v2380
    %v2703 = vpack.c.b16 %v2388, %v2381
    %v2704 = vpack.c.b16 %v2396, %v2389
    %v2705 = vpack.c.b16 %v2397, %v2390
    %v2706 = vpack.c.b16 %v2398, %v2391
    %v2707 = vpack.c.b16 %v2399, %v2392
    %v2708 = vpack.c.b16 %v2400, %v2393
    %v2709 = vpack.c.b16 %v2401, %v2394
    %v2710 = vpack.c.b16 %v2402, %v2395
    %v2711 = vpack.c.b16 %v2410, %v2403
    %v2712 = vpack.c.b16 %v2411, %v2404
    %v2713 = vpack.c.b16 %v2412, %v2405
    %v2714 = vpack.c.b16 %v2413, %v2406
    %v2715 = vpack.c.b16 %v2414, %v2407
    %v2716 = vpack.c.b16 %v2415, %v2408
    %v2717 = vpack.c.b16 %v2416, %v2409
    %v2718 = vpack.c.b16 %v2424, %v2417
    %v2719 = vpack.c.b16 %v2425, %v2418
    %v2720 = vpack.c.b16 %v2426, %v2419
    %v2721 = vpack.c.b16 %v2427, %v2420
    %v2722 = vpack.c.b16 %v2428, %v2421
    %v2723 = vpack.c.b16 %v2429, %v2422
    %v2724 = vpack.c.b16 %v2430, %v2423
    %v2725 = vpack.c.b16 %v2438, %v2431
    %v2726 = vpack.c.b16 %v2439, %v2432
    %v2727 = vpack.c.b16 %v2440, %v2433
    %v2728 = vpack.c.b16 %v2441, %v2434
    %v2729 = vpack.c.b16 %v2442, %v2435
    %v2730 = vpack.c.b16 %v2443, %v2436
    %v2731 = vpack.c.b16 %v2444, %v2437
    %v2732 = vpack.c.b16 %v2452, %v2445
    %v2733 = vpack.c.b16 %v2453, %v2446
    %v2734 = vpack.c.b16 %v2454, %v2447
    %v2735 = vpack.c.b16 %v2455, %v2448
    %v2736 = vpack.c.b16 %v2456, %v2449
    %v2737 = vpack.c.b16 %v2457, %v2450
    %v2738 = vpack.c.b16 %v2458, %v2451
    %v2739 = vpack.c.b16 %v2466, %v2459
    %v2740 = vpack.c.b16 %v2467, %v2460
    %v2741 = vpack.c.b16 %v2468, %v2461
    %v2742 = vpack.c.b16 %v2469, %v2462
    %v2743 = vpack.c.b16 %v2470, %v2463
    %v2744 = vpack.c.b16 %v2471, %v2464
    %v2745 = vpack.c.b16 %v2472, %v2465
    %v2746 = vpack.c.b16 %v2480, %v2473
    %v2747 = vpack.c.b16 %v2481, %v2474
    %v2748 = vpack.c.b16 %v2482, %v2475
    %v2749 = vpack.c.b16 %v2483, %v2476
    %v2750 = vpack.c.b16 %v2484, %v2477
    %v2751 = vpack.c.b16 %v2485, %v2478
    %v2752 = vpack.c.b16 %v2486, %v2479
    %v2753 = vpack.c.b16 %v2494, %v2487
    %v2754 = vpack.c.b16 %v2495, %v2488
    %v2755 = vpack.c.b16 %v2496, %v2489
    %v2756 = vpack.c.b16 %v2497, %v2490
    %v2757 = vpack.c.b16 %v2498, %v2491
    %v2758 = vpack.c.b16 %v2499, %v2492
    %v2759 = vpack.c.b16 %v2500, %v2493
    %v2760 = vpack.c.b16 %v2508, %v2501
    %v2761 = vpack.c.b16 %v2509, %v2502
    %v2762 = vpack.c.b16 %v2510, %v2503
    %v2763 = vpack.c.b16 %v2511, %v2504
    %v2764 = vpack.c.b16 %v2512, %v2505
    %v2765 = vpack.c.b16 %v2513, %v2506
    %v2766 = vpack.c.b16 %v2514, %v2507
    %v2767 = vpack.c.b16 %v2522, %v2515
    %v2768 = vpack.c.b16 %v2523, %v2516
    %v2769 = vpack.c.b16 %v2524, %v2517
    %v2770 = vpack.c.b16 %v2525, %v2518
    %v2771 = vpack.c.b16 %v2526, %v2519
    %v2772 = vpack.c.b16 %v2527, %v2520
    %v2773 = vpack.c.b16 %v2528, %v2521
    %v2774 = vpack.c.b16 %v2536, %v2529
    %v2775 = vpack.c.b16 %v2537, %v2530
    %v2776 = vpack.c.b16 %v2538, %v2531
    %v2777 = vpack.c.b16 %v2539, %v2532
    %v2778 = vpack.c.b16 %v2540, %v2533
    %v2779 = vpack.c.b16 %v2541, %v2534
    %v2780 = vpack.c.b16 %v2542, %v2535
    %v2781 = vpack.c.b16 %v2550, %v2543
    %v2782 = vpack.c.b16 %v2551, %v2544
    %v2783 = vpack.c.b16 %v2552, %v2545
    %v2784 = vpack.c.b16 %v2553, %v2546
    %v2785 = vpack.c.b16 %v2554, %v2547
    %v2786 = vpack.c.b16 %v2555, %v2548
    %v2787 = vpack.c.b16 %v2556, %v2549
    %v2788 = vpack.c.b16 %v2564, %v2557
    %v2789 = vpack.c.b16 %v2565, %v2558
    %v2790 = vpack.c.b16 %v2566, %v2559
    %v2791 = vpack.c.b16 %v2567, %v2560
    %v2792 = vpack.c.b16 %v2568, %v2561
    %v2793 = vpack.c.b16 %v2569, %v2562
    %v2794 = vpack.c.b16 %v2570, %v2563
    %3019 = vmatprep.subr.bf16.mxu0 %v2572
    %3020 = vmatpush1.bf16.msra.mxu0 %v2571
    %3021 = vmatprep.subr.bf16.mxu0 %v2579
    %3022 = vmatpush1.bf16.msra.mxu0 %v2578
    %3023 = vmatprep.subr.bf16.mxu0 %v2586
    %3024 = vmatpush1.bf16.msra.mxu0 %v2585
    %3025 = vmatprep.subr.bf16.mxu0 %v2593
    %3026 = vmatpush1.bf16.msra.mxu0 %v2592
    %3027 = vmatprep.subr.bf16.mxu0 %v2600
    %3028 = vmatpush1.bf16.msra.mxu0 %v2599
    %3029 = vmatprep.subr.bf16.mxu0 %v2607
    %3030 = vmatpush1.bf16.msra.mxu0 %v2606
    %3031 = vmatprep.subr.bf16.mxu0 %v2614
    %3032 = vmatpush1.bf16.msra.mxu0 %v2613
    %3033 = vmatprep.subr.bf16.mxu0 %v2621
    %3034 = vmatpush1.bf16.msra.mxu0 %v2620
    %3035 = vmatprep.subr.bf16.mxu0 %v2628
    %3036 = vmatpush1.bf16.msra.mxu0 %v2627
    %3037 = vmatprep.subr.bf16.mxu0 %v2635
    %3038 = vmatpush1.bf16.msra.mxu0 %v2634
    %3039 = vmatprep.subr.bf16.mxu0 %v2642
    %3040 = vmatpush1.bf16.msra.mxu0 %v2641
    %3041 = vmatprep.subr.bf16.mxu0 %v2649
    %3042 = vmatpush1.bf16.msra.mxu0 %v2648
    %3043 = vmatprep.subr.bf16.mxu0 %v2656
    %3044 = vmatpush1.bf16.msra.mxu0 %v2655
    %3045 = vmatprep.subr.bf16.mxu0 %v2663
    %3046 = vmatpush1.bf16.msra.mxu0 %v2662
    %3047 = vmatprep.subr.bf16.mxu0 %v2670
    %3048 = vmatpush1.bf16.msra.mxu0 %v2669
    %3049 = vmatprep.subr.bf16.mxu0 %v2677
    %3050 = vmatpush1.bf16.msra.mxu0 %v2676
    %3051 = vmatprep.mubr.bf16.mxu0 %v1571
    %3052 = vmatmul.mubr.bf16.gmra.mrb[0].mxu0 %v1570
    %v3053 = vpop.f32.mrb[0].mxu0
    %v3054 = vadd.f32 %v1835, %v3053
    %v3055 = vpop.f32.mrb[0].mxu0
    %v3056 = vadd.f32 %v1839, %v3055
    %v3057 = vpop.f32.mrb[0].mxu0
    %v3058 = vpop.f32.mrb[0].mxu0
    %3059 = vdwg.mxu0
    %3060 = vmatprep.subr.bf16.mxu0 %v2684
    %3061 = vmatpush1.bf16.msra.mxu0 %v2683
    %3062 = vmatprep.subr.bf16.mxu0 %v2691
    %3063 = vmatpush1.bf16.msra.mxu0 %v2690
    %3064 = vmatprep.subr.bf16.mxu0 %v2698
    %3065 = vmatpush1.bf16.msra.mxu0 %v2697
    %3066 = vmatprep.subr.bf16.mxu0 %v2705
    %3067 = vmatpush1.bf16.msra.mxu0 %v2704
    %3068 = vmatprep.subr.bf16.mxu0 %v2712
    %3069 = vmatpush1.bf16.msra.mxu0 %v2711
    %3070 = vmatprep.subr.bf16.mxu0 %v2719
    %3071 = vmatpush1.bf16.msra.mxu0 %v2718
    %3072 = vmatprep.subr.bf16.mxu0 %v2726
    %3073 = vmatpush1.bf16.msra.mxu0 %v2725
    %3074 = vmatprep.subr.bf16.mxu0 %v2733
    %3075 = vmatpush1.bf16.msra.mxu0 %v2732
    %3076 = vmatprep.subr.bf16.mxu0 %v2740
    %3077 = vmatpush1.bf16.msra.mxu0 %v2739
    %3078 = vmatprep.subr.bf16.mxu0 %v2747
    %3079 = vmatpush1.bf16.msra.mxu0 %v2746
    %3080 = vmatprep.subr.bf16.mxu0 %v2754
    %3081 = vmatpush1.bf16.msra.mxu0 %v2753
    %3082 = vmatprep.subr.bf16.mxu0 %v2761
    %3083 = vmatpush1.bf16.msra.mxu0 %v2760
    %3084 = vmatprep.subr.bf16.mxu0 %v2768
    %3085 = vmatpush1.bf16.msra.mxu0 %v2767
    %3086 = vmatprep.subr.bf16.mxu0 %v2775
    %3087 = vmatpush1.bf16.msra.mxu0 %v2774
    %3088 = vmatprep.subr.bf16.mxu0 %v2782
    %3089 = vmatpush1.bf16.msra.mxu0 %v2781
    %3090 = vmatprep.subr.bf16.mxu0 %v2789
    %3091 = vmatpush1.bf16.msra.mxu0 %v2788
    %3092 = vmatprep.mubr.bf16.mxu0 %v1573
    %3093 = vmatmul.mubr.bf16.gmra.mrb[0].mxu0 %v1572
    %v3094 = vpop.f32.mrb[0].mxu0
    %v3095 = vadd.f32 %v3054, %v3094
    %v3096 = vpop.f32.mrb[0].mxu0
    %v3097 = vadd.f32 %v3056, %v3096
    %v3098 = vpop.f32.mrb[0].mxu0
    %v3099 = vpop.f32.mrb[0].mxu0
    %3100 = vdwg.mxu0
    %3101 = vmatprep.subr.bf16.mxu0 %v2574
    %3102 = vmatpush1.bf16.msra.mxu0 %v2573
    %3103 = vmatprep.subr.bf16.mxu0 %v2581
    %3104 = vmatpush1.bf16.msra.mxu0 %v2580
    %3105 = vmatprep.subr.bf16.mxu0 %v2588
    %3106 = vmatpush1.bf16.msra.mxu0 %v2587
    %3107 = vmatprep.subr.bf16.mxu0 %v2595
    %3108 = vmatpush1.bf16.msra.mxu0 %v2594
    %3109 = vmatprep.subr.bf16.mxu0 %v2602
    %3110 = vmatpush1.bf16.msra.mxu0 %v2601
    %3111 = vmatprep.subr.bf16.mxu0 %v2609
    %3112 = vmatpush1.bf16.msra.mxu0 %v2608
    %3113 = vmatprep.subr.bf16.mxu0 %v2616
    %3114 = vmatpush1.bf16.msra.mxu0 %v2615
    %3115 = vmatprep.subr.bf16.mxu0 %v2623
    %3116 = vmatpush1.bf16.msra.mxu0 %v2622
    %3117 = vmatprep.subr.bf16.mxu0 %v2630
    %3118 = vmatpush1.bf16.msra.mxu0 %v2629
    %3119 = vmatprep.subr.bf16.mxu0 %v2637
    %3120 = vmatpush1.bf16.msra.mxu0 %v2636
    %3121 = vmatprep.subr.bf16.mxu0 %v2644
    %3122 = vmatpush1.bf16.msra.mxu0 %v2643
    %3123 = vmatprep.subr.bf16.mxu0 %v2651
    %3124 = vmatpush1.bf16.msra.mxu0 %v2650
    %3125 = vmatprep.subr.bf16.mxu0 %v2658
    %3126 = vmatpush1.bf16.msra.mxu0 %v2657
    %3127 = vmatprep.subr.bf16.mxu0 %v2665
    %3128 = vmatpush1.bf16.msra.mxu0 %v2664
    %3129 = vmatprep.subr.bf16.mxu0 %v2672
    %3130 = vmatpush1.bf16.msra.mxu0 %v2671
    %3131 = vmatprep.subr.bf16.mxu0 %v2679
    %3132 = vmatpush1.bf16.msra.mxu0 %v2678
    %3133 = vmatprep.mubr.bf16.mxu0 %v1571
    %3134 = vmatmul.mubr.bf16.gmra.mrb[0].mxu0 %v1570
    %v3135 = vpop.f32.mrb[0].mxu0
    %v3136 = vadd.f32 %v1843, %v3135
    %v3137 = vpop.f32.mrb[0].mxu0
    %v3138 = vadd.f32 %v1847, %v3137
    %v3139 = vpop.f32.mrb[0].mxu0
    %v3140 = vpop.f32.mrb[0].mxu0
    %3141 = vdwg.mxu0
    %3142 = vmatprep.subr.bf16.mxu0 %v2686
    %3143 = vmatpush1.bf16.msra.mxu0 %v2685
    %3144 = vmatprep.subr.bf16.mxu0 %v2693
    %3145 = vmatpush1.bf16.msra.mxu0 %v2692
    %3146 = vmatprep.subr.bf16.mxu0 %v2700
    %3147 = vmatpush1.bf16.msra.mxu0 %v2699
    %3148 = vmatprep.subr.bf16.mxu0 %v2707
    %3149 = vmatpush1.bf16.msra.mxu0 %v2706
    %3150 = vmatprep.subr.bf16.mxu0 %v2714
    %3151 = vmatpush1.bf16.msra.mxu0 %v2713
    %3152 = vmatprep.subr.bf16.mxu0 %v2721
    %3153 = vmatpush1.bf16.msra.mxu0 %v2720
    %3154 = vmatprep.subr.bf16.mxu0 %v2728
    %3155 = vmatpush1.bf16.msra.mxu0 %v2727
    %3156 = vmatprep.subr.bf16.mxu0 %v2735
    %3157 = vmatpush1.bf16.msra.mxu0 %v2734
    %3158 = vmatprep.subr.bf16.mxu0 %v2742
    %3159 = vmatpush1.bf16.msra.mxu0 %v2741
    %3160 = vmatprep.subr.bf16.mxu0 %v2749
    %3161 = vmatpush1.bf16.msra.mxu0 %v2748
    %3162 = vmatprep.subr.bf16.mxu0 %v2756
    %3163 = vmatpush1.bf16.msra.mxu0 %v2755
    %3164 = vmatprep.subr.bf16.mxu0 %v2763
    %3165 = vmatpush1.bf16.msra.mxu0 %v2762
    %3166 = vmatprep.subr.bf16.mxu0 %v2770
    %3167 = vmatpush1.bf16.msra.mxu0 %v2769
    %3168 = vmatprep.subr.bf16.mxu0 %v2777
    %3169 = vmatpush1.bf16.msra.mxu0 %v2776
    %3170 = vmatprep.subr.bf16.mxu0 %v2784
    %3171 = vmatpush1.bf16.msra.mxu0 %v2783
    %3172 = vmatprep.subr.bf16.mxu0 %v2791
    %3173 = vmatpush1.bf16.msra.mxu0 %v2790
    %3174 = vmatprep.mubr.bf16.mxu0 %v1573
    %3175 = vmatmul.mubr.bf16.gmra.mrb[0].mxu0 %v1572
    %v3176 = vpop.f32.mrb[0].mxu0
    %v3177 = vadd.f32 %v3136, %v3176
    %v3178 = vpop.f32.mrb[0].mxu0
    %v3179 = vadd.f32 %v3138, %v3178
    %v3180 = vpop.f32.mrb[0].mxu0
    %v3181 = vpop.f32.mrb[0].mxu0
    %3182 = vdwg.mxu0
    %3183 = vmatprep.subr.bf16.mxu0 %v2576
    %3184 = vmatpush1.bf16.msra.mxu0 %v2575
    %3185 = vmatprep.subr.bf16.mxu0 %v2583
    %3186 = vmatpush1.bf16.msra.mxu0 %v2582
    %3187 = vmatprep.subr.bf16.mxu0 %v2590
    %3188 = vmatpush1.bf16.msra.mxu0 %v2589
    %3189 = vmatprep.subr.bf16.mxu0 %v2597
    %3190 = vmatpush1.bf16.msra.mxu0 %v2596
    %3191 = vmatprep.subr.bf16.mxu0 %v2604
    %3192 = vmatpush1.bf16.msra.mxu0 %v2603
    %3193 = vmatprep.subr.bf16.mxu0 %v2611
    %3194 = vmatpush1.bf16.msra.mxu0 %v2610
    %3195 = vmatprep.subr.bf16.mxu0 %v2618
    %3196 = vmatpush1.bf16.msra.mxu0 %v2617
    %3197 = vmatprep.subr.bf16.mxu0 %v2625
    %3198 = vmatpush1.bf16.msra.mxu0 %v2624
    %3199 = vmatprep.subr.bf16.mxu0 %v2632
    %3200 = vmatpush1.bf16.msra.mxu0 %v2631
    %3201 = vmatprep.subr.bf16.mxu0 %v2639
    %3202 = vmatpush1.bf16.msra.mxu0 %v2638
    %3203 = vmatprep.subr.bf16.mxu0 %v2646
    %3204 = vmatpush1.bf16.msra.mxu0 %v2645
    %3205 = vmatprep.subr.bf16.mxu0 %v2653
    %3206 = vmatpush1.bf16.msra.mxu0 %v2652
    %3207 = vmatprep.subr.bf16.mxu0 %v2660
    %3208 = vmatpush1.bf16.msra.mxu0 %v2659
    %3209 = vmatprep.subr.bf16.mxu0 %v2667
    %3210 = vmatpush1.bf16.msra.mxu0 %v2666
    %3211 = vmatprep.subr.bf16.mxu0 %v2674
    %3212 = vmatpush1.bf16.msra.mxu0 %v2673
    %3213 = vmatprep.subr.bf16.mxu0 %v2681
    %3214 = vmatpush1.bf16.msra.mxu0 %v2680
    %3215 = vmatprep.mubr.bf16.mxu0 %v1571
    %3216 = vmatmul.mubr.bf16.gmra.mrb[0].mxu0 %v1570
    %v3217 = vpop.f32.mrb[0].mxu0
    %v3218 = vadd.f32 %v1851, %v3217
    %v3219 = vpop.f32.mrb[0].mxu0
    %v3220 = vadd.f32 %v1855, %v3219
    %v3221 = vpop.f32.mrb[0].mxu0
    %v3222 = vpop.f32.mrb[0].mxu0
    %3223 = vdwg.mxu0
    %3224 = vmatprep.subr.bf16.mxu0 %v2688
    %3225 = vmatpush1.bf16.msra.mxu0 %v2687
    %3226 = vmatprep.subr.bf16.mxu0 %v2695
    %3227 = vmatpush1.bf16.msra.mxu0 %v2694
    %3228 = vmatprep.subr.bf16.mxu0 %v2702
    %3229 = vmatpush1.bf16.msra.mxu0 %v2701
    %3230 = vmatprep.subr.bf16.mxu0 %v2709
    %3231 = vmatpush1.bf16.msra.mxu0 %v2708
    %3232 = vmatprep.subr.bf16.mxu0 %v2716
    %3233 = vmatpush1.bf16.msra.mxu0 %v2715
    %3234 = vmatprep.subr.bf16.mxu0 %v2723
    %3235 = vmatpush1.bf16.msra.mxu0 %v2722
    %3236 = vmatprep.subr.bf16.mxu0 %v2730
    %3237 = vmatpush1.bf16.msra.mxu0 %v2729
    %3238 = vmatprep.subr.bf16.mxu0 %v2737
    %3239 = vmatpush1.bf16.msra.mxu0 %v2736
    %3240 = vmatprep.subr.bf16.mxu0 %v2744
    %3241 = vmatpush1.bf16.msra.mxu0 %v2743
    %3242 = vmatprep.subr.bf16.mxu0 %v2751
    %3243 = vmatpush1.bf16.msra.mxu0 %v2750
    %3244 = vmatprep.subr.bf16.mxu0 %v2758
    %3245 = vmatpush1.bf16.msra.mxu0 %v2757
    %3246 = vmatprep.subr.bf16.mxu0 %v2765
    %3247 = vmatpush1.bf16.msra.mxu0 %v2764
    %3248 = vmatprep.subr.bf16.mxu0 %v2772
    %3249 = vmatpush1.bf16.msra.mxu0 %v2771
    %3250 = vmatprep.subr.bf16.mxu0 %v2779
    %3251 = vmatpush1.bf16.msra.mxu0 %v2778
    %3252 = vmatprep.subr.bf16.mxu0 %v2786
    %3253 = vmatpush1.bf16.msra.mxu0 %v2785
    %3254 = vmatprep.subr.bf16.mxu0 %v2793
    %3255 = vmatpush1.bf16.msra.mxu0 %v2792
    %3256 = vmatprep.mubr.bf16.mxu0 %v1573
    %3257 = vmatmul.mubr.bf16.gmra.mrb[0].mxu0 %v1572
    %v3258 = vpop.f32.mrb[0].mxu0
    %v3259 = vadd.f32 %v3218, %v3258
    %v3260 = vpop.f32.mrb[0].mxu0
    %v3261 = vadd.f32 %v3220, %v3260
    %v3262 = vpop.f32.mrb[0].mxu0
    %v3263 = vpop.f32.mrb[0].mxu0
    %3264 = vdwg.mxu0
    %3265 = vmatprep.subr.bf16.mxu0 0
    %3266 = vmatpush1.bf16.msra.mxu0 %v2577
    %3267 = vmatprep.subr.bf16.mxu0 0
    %3268 = vmatpush1.bf16.msra.mxu0 %v2584
    %3269 = vmatprep.subr.bf16.mxu0 0
    %3270 = vmatpush1.bf16.msra.mxu0 %v2591
    %3271 = vmatprep.subr.bf16.mxu0 0
    %3272 = vmatpush1.bf16.msra.mxu0 %v2598
    %3273 = vmatprep.subr.bf16.mxu0 0
    %3274 = vmatpush1.bf16.msra.mxu0 %v2605
    %3275 = vmatprep.subr.bf16.mxu0 0
    %3276 = vmatpush1.bf16.msra.mxu0 %v2612
    %3277 = vmatprep.subr.bf16.mxu0 0
    %3278 = vmatpush1.bf16.msra.mxu0 %v2619
    %3279 = vmatprep.subr.bf16.mxu0 0
    %3280 = vmatpush1.bf16.msra.mxu0 %v2626
    %3281 = vmatprep.subr.bf16.mxu0 0
    %3282 = vmatpush1.bf16.msra.mxu0 %v2633
    %3283 = vmatprep.subr.bf16.mxu0 0
    %3284 = vmatpush1.bf16.msra.mxu0 %v2640
    %3285 = vmatprep.subr.bf16.mxu0 0
    %3286 = vmatpush1.bf16.msra.mxu0 %v2647
    %3287 = vmatprep.subr.bf16.mxu0 0
    %3288 = vmatpush1.bf16.msra.mxu0 %v2654
    %3289 = vmatprep.subr.bf16.mxu0 0
    %3290 = vmatpush1.bf16.msra.mxu0 %v2661
    %3291 = vmatprep.subr.bf16.mxu0 0
    %3292 = vmatpush1.bf16.msra.mxu0 %v2668
    %3293 = vmatprep.subr.bf16.mxu0 0
    %3294 = vmatpush1.bf16.msra.mxu0 %v2675
    %3295 = vmatprep.subr.bf16.mxu0 0
    %3296 = vmatpush1.bf16.msra.mxu0 %v2682
    %3297 = vmatprep.mubr.bf16.mxu0 %v1571
    %3298 = vmatmul.mubr.bf16.gmra.mrb[0].mxu0 %v1570
    %v3299 = vpop.f32.mrb[0].mxu0
    %v3300 = vadd.f32 %v1859, %v3299
    %v3301 = vpop.f32.mrb[0].mxu0
    %v3302 = vpop.f32.mrb[0].mxu0
    %v3303 = vpop.f32.mrb[0].mxu0
    %3304 = vdwg.mxu0
    %3305 = vmatprep.subr.bf16.mxu0 0
    %3306 = vmatpush1.bf16.msra.mxu0 %v2689
    %3307 = vmatprep.subr.bf16.mxu0 0
    %3308 = vmatpush1.bf16.msra.mxu0 %v2696
    %3309 = vmatprep.subr.bf16.mxu0 0
    %3310 = vmatpush1.bf16.msra.mxu0 %v2703
    %3311 = vmatprep.subr.bf16.mxu0 0
    %3312 = vmatpush1.bf16.msra.mxu0 %v2710
    %3313 = vmatprep.subr.bf16.mxu0 0
    %3314 = vmatpush1.bf16.msra.mxu0 %v2717
    %3315 = vmatprep.subr.bf16.mxu0 0
    %3316 = vmatpush1.bf16.msra.mxu0 %v2724
    %3317 = vmatprep.subr.bf16.mxu0 0
    %3318 = vmatpush1.bf16.msra.mxu0 %v2731
    %3319 = vmatprep.subr.bf16.mxu0 0
    %3320 = vmatpush1.bf16.msra.mxu0 %v2738
    %3321 = vmatprep.subr.bf16.mxu0 0
    %3322 = vmatpush1.bf16.msra.mxu0 %v2745
    %3323 = vmatprep.subr.bf16.mxu0 0
    %3324 = vmatpush1.bf16.msra.mxu0 %v2752
    %3325 = vmatprep.subr.bf16.mxu0 0
    %3326 = vmatpush1.bf16.msra.mxu0 %v2759
    %3327 = vmatprep.subr.bf16.mxu0 0
    %3328 = vmatpush1.bf16.msra.mxu0 %v2766
    %3329 = vmatprep.subr.bf16.mxu0 0
    %3330 = vmatpush1.bf16.msra.mxu0 %v2773
    %3331 = vmatprep.subr.bf16.mxu0 0
    %3332 = vmatpush1.bf16.msra.mxu0 %v2780
    %3333 = vmatprep.subr.bf16.mxu0 0
    %3334 = vmatpush1.bf16.msra.mxu0 %v2787
    %3335 = vmatprep.subr.bf16.mxu0 0
    %3336 = vmatpush1.bf16.msra.mxu0 %v2794
    %3337 = vmatprep.mubr.bf16.mxu0 %v1573
    %3338 = vmatmul.mubr.bf16.gmra.mrb[0].mxu0 %v1572
    %v3339 = vpop.f32.mrb[0].mxu0
    %v3340 = vadd.f32 %v3300, %v3339
    %v3341 = vpop.f32.mrb[0].mxu0
    %v3342 = vpop.f32.mrb[0].mxu0
    %v3343 = vpop.f32.mrb[0].mxu0
    %3344 = vdwg.mxu0
    %v3345 = vtanh.pop %v3095
    %v3346 = vtanh.pop %v3097
    %v3347 = vtanh.pop %v3177
    %v3348 = vtanh.pop %v3179
    %v3349 = vtanh.pop %v3259
    %v3350 = vtanh.pop %v3261
    %v3351 = vtanh.pop %v3340
    %3352 = vst [vmem:[#allocation2] sm:$0xff] %v3345
    %3353 = vst [vmem:[#allocation2 + $0x8] sm:$0xff] %v3346
    %3354 = vst [vmem:[#allocation2 + $0x10] sm:$0xff] %v3347
    %3355 = vst [vmem:[#allocation2 + $0x18] sm:$0xff] %v3348
    %3356 = vst [vmem:[#allocation2 + $0x20] sm:$0xff] %v3349
    %3357 = vst [vmem:[#allocation2 + $0x28] sm:$0xff] %v3350
    %3358 = vst.msk [vmem:[#allocation2 + $0x30] sm:$0xff] %vm1234, %v3351
    // Predicated region
    $region22: #{tpu_custom_call.1} parent=1 // pred_check
      _
    $region23: #{tpu_custom_call.1} parent=1 // pred_check_branch
      %3360 = sbr.rel (0) target = $region25
    $region24: #{tpu_custom_call.1} parent=1 // pred_region
      %s3362 = ssub.s32 896, 896
      %3363 = vsyncadd [#allocation3], %s3362
      %s3365 = sshll.u32 [#allocation2], 4
      %s3366 = int_to_ptr.vmem [resolvable:$true] %s3365
      %3368 = dma.vmem_to_hbm [thread:$0]  %s3366, 896, %s5, [#allocation3]
    $region25: #{tpu_custom_call.1} parent=1 // pred_fallthru
      _
    // Predicated region
    $region26: #{tpu_custom_call.1} parent=1 // pred_check
      _
    $region27: #{tpu_custom_call.1} parent=1 // pred_check_branch
      %3370 = sbr.rel (0) target = $region29
    $region28: #{tpu_custom_call.1} parent=1 // pred_region
      %3371 = dma.done [#allocation3], 896
    $region29: #{tpu_custom_call.1} parent=1 // pred_fallthru
      _
    %3372 = vsyncpa [#allocation3], 1

</llo_original>
